<compile_context>
chip_gen: v6e
topology: v6e:2x2x1
jax: 0.10.0
libtpu: 0.0.40
codegen_flags: <defaults>
</compile_context>

<pallas_src>
import jax
import jax.numpy as jnp
import numpy as np
from jax import lax
from jax.experimental import pallas as pl
from jax.experimental.pallas import tpu as pltpu


def _round_up(x, m):
    return ((x + m - 1) // m) * m


def bilstm_forward(input_ids, emb_table, w_ih, w_hh, b_ih, b_hh, w_tag, b_tag):
    """Forward pass matching BiLSTMModel.forward (fresh zero h/c state).

    input_ids : (B, T) int32
    emb_table : (V, E)
    w_ih      : (4H, E), w_hh : (4H, H), b_ih/b_hh : (4H,)   (PyTorch LSTM params,
                gate order i, f, g, o)
    w_tag     : (n_tags, H), b_tag : (n_tags,)
    returns   : (T*B, n_tags) log-probs
    """
    B, T = input_ids.shape
    E = emb_table.shape[1]
    H = w_hh.shape[1]
    G = 4 * H                                   # packed gate width (i, f, g, o)
    n_tags = w_tag.shape[0]
    TP = _round_up(max(n_tags, 128), 128)       # lane-dense output width
    TB = T * B

    # ---- glue: embedding lookup + PyTorch `.view(T, B, -1)` reshape (NOT transpose) ----
    embeds = jnp.take(emb_table, input_ids, axis=0)            # (B, T, E)
    x = jnp.reshape(embeds, (TB, E)).astype(jnp.float32)       # row t*B + b == (t, b)

    # ---- weight prep: transposes only; gates stay packed at native 4H width ----
    wih_t = jnp.transpose(w_ih).astype(jnp.float32)            # (E, 4H)
    whh_t = jnp.transpose(w_hh).astype(jnp.float32)            # (H, 4H)
    bias = (b_ih + b_hh).reshape(1, G).astype(jnp.float32)     # (1, 4H)
    wtag_p = jnp.pad(jnp.transpose(w_tag).astype(jnp.float32),
                     ((0, 0), (0, TP - n_tags)))               # (H, TP)
    btag_p = jnp.pad(b_tag.reshape(1, n_tags).astype(jnp.float32),
                     ((0, 0), (0, TP - n_tags)))               # (1, TP)

    # Bound the unroll for larger T (full unroll only for short sequences).
    unroll = T if T <= 8 else 8

    def kernel(x_ref, wih_ref, whh_ref, b_ref, wtag_ref, btag_ref, out_ref,
               xw_scr, hs_scr):
        # 1) Hoisted, time-parallel input projection + bias (one big MXU matmul).
        xw_scr[...] = (jnp.dot(x_ref[...], wih_ref[...],
                               preferred_element_type=jnp.float32)
                       + b_ref[...])                            # (T*B, 4H)

        whh = whh_ref[...]                                      # (H, 4H), loop-invariant

        # 2) Serial LSTM recurrence; h/c live as register values.
        def step(t, carry):
            h, c = carry                                        # (B, H) each
            off = pl.multiple_of(t * B, B)
            gates = (xw_scr[pl.ds(off, B), :]
                     + jnp.dot(h, whh, preferred_element_type=jnp.float32))  # (B, 4H)
            sig = jax.nn.sigmoid(gates)          # one EUP pass over the packed slab
            i_g = sig[:, 0 * H:1 * H]
            f_g = sig[:, 1 * H:2 * H]
            g_g = jnp.tanh(gates[:, 2 * H:3 * H])
            o_g = sig[:, 3 * H:4 * H]
            c_new = f_g * c + i_g * g_g
            h_new = o_g * jnp.tanh(c_new)
            hs_scr[pl.ds(off, B), :] = h_new
            return (h_new, c_new)

        h0 = jnp.zeros((B, H), jnp.float32)                     # init_hidden(): zeros
        c0 = jnp.zeros((B, H), jnp.float32)
        lax.fori_loop(0, T, step, (h0, c0), unroll=unroll)

        # 3) Hoisted tag head + log_softmax (masked over the real n_tags lanes;
        #    TP=128 output kept lane-dense on purpose for unmasked vst).
        logits = (jnp.dot(hs_scr[...], wtag_ref[...],
                          preferred_element_type=jnp.float32)
                  + btag_ref[...])                              # (T*B, TP)
        lane = lax.broadcasted_iota(jnp.int32, logits.shape, 1)
        masked = jnp.where(lane < n_tags, logits, jnp.float32(-1e30))
        m = jnp.max(masked, axis=1, keepdims=True)
        s = masked - m
        lse = jnp.log(jnp.sum(jnp.exp(s), axis=1, keepdims=True))
        out_ref[...] = s - lse

    # VMEM scaling guard: raise the scoped limit only when the footprint would
    # exceed the smallest default (16 MiB on v5e); cap at 48 MiB (safe on v7x's
    # 64 MiB physical VMEM).  At the demo sizes this stays None (defaults).
    vmem_bytes = 4 * (2 * (TB * E + E * G + H * G + G + H * TP + TP + TB * TP)
                      + TB * G + TB * H)
    vmem_limit = None
    if vmem_bytes > 8 * 1024 * 1024:
        vmem_limit = min(int(vmem_bytes * 1.25) + (1 << 20), 48 * 1024 * 1024)

    out_padded = pl.pallas_call(
        kernel,
        out_shape=jax.ShapeDtypeStruct((TB, TP), jnp.float32),
        grid_spec=pltpu.PrefetchScalarGridSpec(
            num_scalar_prefetch=0,
            grid=(1,),
            in_specs=[
                pl.BlockSpec((TB, E), lambda i: (0, 0)),
                pl.BlockSpec((E, G), lambda i: (0, 0)),
                pl.BlockSpec((H, G), lambda i: (0, 0)),
                pl.BlockSpec((1, G), lambda i: (0, 0)),
                pl.BlockSpec((H, TP), lambda i: (0, 0)),
                pl.BlockSpec((1, TP), lambda i: (0, 0)),
            ],
            out_specs=pl.BlockSpec((TB, TP), lambda i: (0, 0)),
            scratch_shapes=[
                pltpu.VMEM((TB, G), jnp.float32),    # precomputed xW_ih + bias
                pltpu.VMEM((TB, H), jnp.float32),    # stacked h_t for tag head
            ],
        ),
        compiler_params=pltpu.CompilerParams(
            dimension_semantics=("arbitrary",),
            vmem_limit_bytes=vmem_limit,
        ),
    )(x, wih_t, whh_t, bias, wtag_p, btag_p)

    return out_padded[:, :n_tags]                               # (T*B, n_tags)


def _reference_forward(input_ids, emb_table, w_ih, w_hh, b_ih, b_hh, w_tag, b_tag):
    """Pure-JAX reference reproducing the same PyTorch semantics."""
    B, T = input_ids.shape
    E = emb_table.shape[1]
    H = w_hh.shape[1]
    embeds = jnp.take(emb_table, input_ids, axis=0)
    x = jnp.reshape(embeds, (T, B, E))
    bias = b_ih + b_hh

    def step(carry, x_t):
        h, c = carry
        gates = x_t @ w_ih.T + h @ w_hh.T + bias
        i_g = jax.nn.sigmoid(gates[:, 0 * H:1 * H])
        f_g = jax.nn.sigmoid(gates[:, 1 * H:2 * H])
        g_g = jnp.tanh(gates[:, 2 * H:3 * H])
        o_g = jax.nn.sigmoid(gates[:, 3 * H:4 * H])
        c_new = f_g * c + i_g * g_g
        h_new = o_g * jnp.tanh(c_new)
        return (h_new, c_new), h_new

    h0 = jnp.zeros((B, H), jnp.float32)
    c0 = jnp.zeros((B, H), jnp.float32)
    _, hs = lax.scan(step, (h0, c0), x)                      # (T, B, H)
    tag = hs.reshape(T * B, H) @ w_tag.T + b_tag
    return jax.nn.log_softmax(tag, axis=1)


if __name__ == "__main__":
    # Small, deterministic configuration.
    vocab_size, n_tags, embedding_dim, n_hidden_rnn = 50, 8, 16, 32
    B, T = 8, 8

    key = jax.random.PRNGKey(0)
    ks = jax.random.split(key, 8)

    emb_table = jax.random.normal(ks[0], (vocab_size, embedding_dim), jnp.float32) * 0.1
    w_ih = jax.random.normal(ks[1], (4 * n_hidden_rnn, embedding_dim), jnp.float32) * 0.1
    w_hh = jax.random.normal(ks[2], (4 * n_hidden_rnn, n_hidden_rnn), jnp.float32) * 0.1
    b_ih = jax.random.normal(ks[3], (4 * n_hidden_rnn,), jnp.float32) * 0.1
    b_hh = jax.random.normal(ks[4], (4 * n_hidden_rnn,), jnp.float32) * 0.1
    w_tag = jax.random.normal(ks[5], (n_tags, n_hidden_rnn), jnp.float32) * 0.1
    b_tag = jax.random.normal(ks[6], (n_tags,), jnp.float32) * 0.1
    input_ids = jax.random.randint(ks[7], (B, T), 0, vocab_size, jnp.int32)

    log_probs = bilstm_forward(input_ids, emb_table, w_ih, w_hh,
                               b_ih, b_hh, w_tag, b_tag)
    log_probs = jax.block_until_ready(log_probs)

    ref = _reference_forward(input_ids, emb_table, w_ih, w_hh,
                             b_ih, b_hh, w_tag, b_tag)
    np.testing.assert_allclose(np.asarray(log_probs), np.asarray(ref),
                               rtol=1e-4, atol=1e-4)
    assert log_probs.shape == (T * B, n_tags)
    print("KERNEL_OK")
</pallas_src>

<mosaic_0001>
module attributes {stable_mosaic.version = 11 : i64} {
  func.func @kernel(%arg0: i32, %arg1: memref<64x16xf32, #tpu.memory_space<vmem>>, %arg2: memref<16x128xf32, #tpu.memory_space<vmem>>, %arg3: memref<32x128xf32, #tpu.memory_space<vmem>>, %arg4: memref<1x128xf32, #tpu.memory_space<vmem>>, %arg5: memref<32x128xf32, #tpu.memory_space<vmem>>, %arg6: memref<1x128xf32, #tpu.memory_space<vmem>>, %arg7: memref<64x128xf32, #tpu.memory_space<vmem>>, %arg8: memref<64x128xf32, #tpu.memory_space<vmem>>, %arg9: memref<64x32xf32, #tpu.memory_space<vmem>>) attributes {dimension_semantics = [#tpu.dimension_semantics<arbitrary>], iteration_bounds = array<i64: 1>, scalar_prefetch = 0 : i64, scratch_operands = 2 : i64, tpu.core_type = #tpu.core_type<tc>, window_params = [{pipeline_mode = #tpu.pipeline_mode<synchronous>, transform_indices = @transform_0, window_bounds = array<i64: 64, 16>}, {pipeline_mode = #tpu.pipeline_mode<synchronous>, transform_indices = @transform_1, window_bounds = array<i64: 16, 128>}, {pipeline_mode = #tpu.pipeline_mode<synchronous>, transform_indices = @transform_2, window_bounds = array<i64: 32, 128>}, {pipeline_mode = #tpu.pipeline_mode<synchronous>, transform_indices = @transform_3, window_bounds = array<i64: 1, 128>}, {pipeline_mode = #tpu.pipeline_mode<synchronous>, transform_indices = @transform_4, window_bounds = array<i64: 32, 128>}, {pipeline_mode = #tpu.pipeline_mode<synchronous>, transform_indices = @transform_5, window_bounds = array<i64: 1, 128>}, {pipeline_mode = #tpu.pipeline_mode<synchronous>, transform_indices = @transform_6, window_bounds = array<i64: 64, 128>}]} {
    %c0 = arith.constant 0 : index
    %c0_0 = arith.constant 0 : index
    %0 = vector.load %arg1[%c0, %c0_0] : memref<64x16xf32, #tpu.memory_space<vmem>>, vector<64x16xf32>
    %c0_1 = arith.constant 0 : index
    %c0_2 = arith.constant 0 : index
    %1 = vector.load %arg2[%c0_1, %c0_2] : memref<16x128xf32, #tpu.memory_space<vmem>>, vector<16x128xf32>
    %cst = arith.constant dense<0.000000e+00> : vector<64x128xf32>
    %2 = tpu.matmul %0, %1, %cst {dimension_numbers = #tpu.dot_dimension_numbers<[1], [0], [0], [1], [0, 0, 1, 1], [], []>} : vector<64x16xf32>, vector<16x128xf32>, vector<64x128xf32> -> vector<64x128xf32>
    %c0_3 = arith.constant 0 : index
    %c0_4 = arith.constant 0 : index
    %3 = vector.load %arg4[%c0_3, %c0_4] : memref<1x128xf32, #tpu.memory_space<vmem>>, vector<1x128xf32>
    %4 = vector.broadcast %3 : vector<1x128xf32> to vector<64x128xf32>
    %5 = arith.addf %2, %4 : vector<64x128xf32>
    %c0_5 = arith.constant 0 : index
    %c0_6 = arith.constant 0 : index
    %6 = vector.load %arg8[%c0_5, %c0_6] : memref<64x128xf32, #tpu.memory_space<vmem>>, vector<64x128xf32>
    tpu.vector_store %arg8[%c0_5, %c0_6], %5 {strides = array<i32>} : memref<64x128xf32, #tpu.memory_space<vmem>>, vector<64x128xf32>,
    %c0_7 = arith.constant 0 : index
    %c0_8 = arith.constant 0 : index
    %7 = vector.load %arg3[%c0_7, %c0_8] : memref<32x128xf32, #tpu.memory_space<vmem>>, vector<32x128xf32>
    %cst_9 = arith.constant 0.000000e+00 : f32
    %8 = vector.broadcast %cst_9 : f32 to vector<8x32xf32>
    %cst_10 = arith.constant 0.000000e+00 : f32
    %9 = vector.broadcast %cst_10 : f32 to vector<8x32xf32>
    %c0_i32 = arith.constant 0 : i32
    %c8_i32 = arith.constant 8 : i32
    %10 = arith.muli %c0_i32, %c8_i32 : i32
    %11 = tpu.assume_multiple %10, 8 : i32
    %12 = arith.index_cast %11 : i32 to index
    %c0_11 = arith.constant 0 : index
    %13 = vector.load %arg8[%12, %c0_11] : memref<64x128xf32, #tpu.memory_space<vmem>>, vector<8x128xf32>
    %cst_12 = arith.constant dense<0.000000e+00> : vector<8x128xf32>
    %14 = tpu.matmul %8, %7, %cst_12 {dimension_numbers = #tpu.dot_dimension_numbers<[1], [0], [0], [1], [0, 0, 1, 1], [], []>} : vector<8x32xf32>, vector<32x128xf32>, vector<8x128xf32> -> vector<8x128xf32>
    %15 = arith.addf %13, %14 : vector<8x128xf32>
    %16 = arith.negf %15 : vector<8x128xf32>
    %17 = math.exp %16 : vector<8x128xf32>
    %cst_13 = arith.constant 1.000000e+00 : f32
    %18 = vector.broadcast %cst_13 : f32 to vector<8x128xf32>
    %19 = arith.addf %18, %17 : vector<8x128xf32>
    %20 = arith.divf %18, %19 : vector<8x128xf32>
    %21 = vector.extract_strided_slice %20 {offsets = [0, 0], sizes = [8, 32], strides = [1, 1]} : vector<8x128xf32> to vector<8x32xf32>
    %22 = vector.extract_strided_slice %20 {offsets = [0, 32], sizes = [8, 32], strides = [1, 1]} : vector<8x128xf32> to vector<8x32xf32>
    %23 = vector.extract_strided_slice %15 {offsets = [0, 64], sizes = [8, 32], strides = [1, 1]} : vector<8x128xf32> to vector<8x32xf32>
    %24 = math.tanh %23 : vector<8x32xf32>
    %25 = vector.extract_strided_slice %20 {offsets = [0, 96], sizes = [8, 32], strides = [1, 1]} : vector<8x128xf32> to vector<8x32xf32>
    %26 = arith.mulf %22, %9 : vector<8x32xf32>
    %27 = arith.mulf %21, %24 : vector<8x32xf32>
    %28 = arith.addf %26, %27 : vector<8x32xf32>
    %29 = math.tanh %28 : vector<8x32xf32>
    %30 = arith.mulf %25, %29 : vector<8x32xf32>
    %31 = arith.index_cast %11 : i32 to index
    %c0_14 = arith.constant 0 : index
    %32 = vector.load %arg9[%31, %c0_14] : memref<64x32xf32, #tpu.memory_space<vmem>>, vector<8x32xf32>
    tpu.vector_store %arg9[%31, %c0_14], %30 {strides = array<i32>} : memref<64x32xf32, #tpu.memory_space<vmem>>, vector<8x32xf32>,
    %c1_i32 = arith.constant 1 : i32
    %c8_i32_15 = arith.constant 8 : i32
    %33 = arith.muli %c1_i32, %c8_i32_15 : i32
    %34 = tpu.assume_multiple %33, 8 : i32
    %35 = arith.index_cast %34 : i32 to index
    %c0_16 = arith.constant 0 : index
    %36 = vector.load %arg8[%35, %c0_16] : memref<64x128xf32, #tpu.memory_space<vmem>>, vector<8x128xf32>
    %cst_17 = arith.constant dense<0.000000e+00> : vector<8x128xf32>
    %37 = tpu.matmul %30, %7, %cst_17 {dimension_numbers = #tpu.dot_dimension_numbers<[1], [0], [0], [1], [0, 0, 1, 1], [], []>} : vector<8x32xf32>, vector<32x128xf32>, vector<8x128xf32> -> vector<8x128xf32>
    %38 = arith.addf %36, %37 : vector<8x128xf32>
    %39 = arith.negf %38 : vector<8x128xf32>
    %40 = math.exp %39 : vector<8x128xf32>
    %cst_18 = arith.constant 1.000000e+00 : f32
    %41 = vector.broadcast %cst_18 : f32 to vector<8x128xf32>
    %42 = arith.addf %41, %40 : vector<8x128xf32>
    %43 = arith.divf %41, %42 : vector<8x128xf32>
    %44 = vector.extract_strided_slice %43 {offsets = [0, 0], sizes = [8, 32], strides = [1, 1]} : vector<8x128xf32> to vector<8x32xf32>
    %45 = vector.extract_strided_slice %43 {offsets = [0, 32], sizes = [8, 32], strides = [1, 1]} : vector<8x128xf32> to vector<8x32xf32>
    %46 = vector.extract_strided_slice %38 {offsets = [0, 64], sizes = [8, 32], strides = [1, 1]} : vector<8x128xf32> to vector<8x32xf32>
    %47 = math.tanh %46 : vector<8x32xf32>
    %48 = vector.extract_strided_slice %43 {offsets = [0, 96], sizes = [8, 32], strides = [1, 1]} : vector<8x128xf32> to vector<8x32xf32>
    %49 = arith.mulf %45, %28 : vector<8x32xf32>
    %50 = arith.mulf %44, %47 : vector<8x32xf32>
    %51 = arith.addf %49, %50 : vector<8x32xf32>
    %52 = math.tanh %51 : vector<8x32xf32>
    %53 = arith.mulf %48, %52 : vector<8x32xf32>
    %54 = arith.index_cast %34 : i32 to index
    %c0_19 = arith.constant 0 : index
    %55 = vector.load %arg9[%54, %c0_19] : memref<64x32xf32, #tpu.memory_space<vmem>>, vector<8x32xf32>
    tpu.vector_store %arg9[%54, %c0_19], %53 {strides = array<i32>} : memref<64x32xf32, #tpu.memory_space<vmem>>, vector<8x32xf32>,
    %c2_i32 = arith.constant 2 : i32
    %c8_i32_20 = arith.constant 8 : i32
    %56 = arith.muli %c2_i32, %c8_i32_20 : i32
    %57 = tpu.assume_multiple %56, 8 : i32
    %58 = arith.index_cast %57 : i32 to index
    %c0_21 = arith.constant 0 : index
    %59 = vector.load %arg8[%58, %c0_21] : memref<64x128xf32, #tpu.memory_space<vmem>>, vector<8x128xf32>
    %cst_22 = arith.constant dense<0.000000e+00> : vector<8x128xf32>
    %60 = tpu.matmul %53, %7, %cst_22 {dimension_numbers = #tpu.dot_dimension_numbers<[1], [0], [0], [1], [0, 0, 1, 1], [], []>} : vector<8x32xf32>, vector<32x128xf32>, vector<8x128xf32> -> vector<8x128xf32>
    %61 = arith.addf %59, %60 : vector<8x128xf32>
    %62 = arith.negf %61 : vector<8x128xf32>
    %63 = math.exp %62 : vector<8x128xf32>
    %cst_23 = arith.constant 1.000000e+00 : f32
    %64 = vector.broadcast %cst_23 : f32 to vector<8x128xf32>
    %65 = arith.addf %64, %63 : vector<8x128xf32>
    %66 = arith.divf %64, %65 : vector<8x128xf32>
    %67 = vector.extract_strided_slice %66 {offsets = [0, 0], sizes = [8, 32], strides = [1, 1]} : vector<8x128xf32> to vector<8x32xf32>
    %68 = vector.extract_strided_slice %66 {offsets = [0, 32], sizes = [8, 32], strides = [1, 1]} : vector<8x128xf32> to vector<8x32xf32>
    %69 = vector.extract_strided_slice %61 {offsets = [0, 64], sizes = [8, 32], strides = [1, 1]} : vector<8x128xf32> to vector<8x32xf32>
    %70 = math.tanh %69 : vector<8x32xf32>
    %71 = vector.extract_strided_slice %66 {offsets = [0, 96], sizes = [8, 32], strides = [1, 1]} : vector<8x128xf32> to vector<8x32xf32>
    %72 = arith.mulf %68, %51 : vector<8x32xf32>
    %73 = arith.mulf %67, %70 : vector<8x32xf32>
    %74 = arith.addf %72, %73 : vector<8x32xf32>
    %75 = math.tanh %74 : vector<8x32xf32>
    %76 = arith.mulf %71, %75 : vector<8x32xf32>
    %77 = arith.index_cast %57 : i32 to index
    %c0_24 = arith.constant 0 : index
    %78 = vector.load %arg9[%77, %c0_24] : memref<64x32xf32, #tpu.memory_space<vmem>>, vector<8x32xf32>
    tpu.vector_store %arg9[%77, %c0_24], %76 {strides = array<i32>} : memref<64x32xf32, #tpu.memory_space<vmem>>, vector<8x32xf32>,
    %c3_i32 = arith.constant 3 : i32
    %c8_i32_25 = arith.constant 8 : i32
    %79 = arith.muli %c3_i32, %c8_i32_25 : i32
    %80 = tpu.assume_multiple %79, 8 : i32
    %81 = arith.index_cast %80 : i32 to index
    %c0_26 = arith.constant 0 : index
    %82 = vector.load %arg8[%81, %c0_26] : memref<64x128xf32, #tpu.memory_space<vmem>>, vector<8x128xf32>
    %cst_27 = arith.constant dense<0.000000e+00> : vector<8x128xf32>
    %83 = tpu.matmul %76, %7, %cst_27 {dimension_numbers = #tpu.dot_dimension_numbers<[1], [0], [0], [1], [0, 0, 1, 1], [], []>} : vector<8x32xf32>, vector<32x128xf32>, vector<8x128xf32> -> vector<8x128xf32>
    %84 = arith.addf %82, %83 : vector<8x128xf32>
    %85 = arith.negf %84 : vector<8x128xf32>
    %86 = math.exp %85 : vector<8x128xf32>
    %cst_28 = arith.constant 1.000000e+00 : f32
    %87 = vector.broadcast %cst_28 : f32 to vector<8x128xf32>
    %88 = arith.addf %87, %86 : vector<8x128xf32>
    %89 = arith.divf %87, %88 : vector<8x128xf32>
    %90 = vector.extract_strided_slice %89 {offsets = [0, 0], sizes = [8, 32], strides = [1, 1]} : vector<8x128xf32> to vector<8x32xf32>
    %91 = vector.extract_strided_slice %89 {offsets = [0, 32], sizes = [8, 32], strides = [1, 1]} : vector<8x128xf32> to vector<8x32xf32>
    %92 = vector.extract_strided_slice %84 {offsets = [0, 64], sizes = [8, 32], strides = [1, 1]} : vector<8x128xf32> to vector<8x32xf32>
    %93 = math.tanh %92 : vector<8x32xf32>
    %94 = vector.extract_strided_slice %89 {offsets = [0, 96], sizes = [8, 32], strides = [1, 1]} : vector<8x128xf32> to vector<8x32xf32>
    %95 = arith.mulf %91, %74 : vector<8x32xf32>
    %96 = arith.mulf %90, %93 : vector<8x32xf32>
    %97 = arith.addf %95, %96 : vector<8x32xf32>
    %98 = math.tanh %97 : vector<8x32xf32>
    %99 = arith.mulf %94, %98 : vector<8x32xf32>
    %100 = arith.index_cast %80 : i32 to index
    %c0_29 = arith.constant 0 : index
    %101 = vector.load %arg9[%100, %c0_29] : memref<64x32xf32, #tpu.memory_space<vmem>>, vector<8x32xf32>
    tpu.vector_store %arg9[%100, %c0_29], %99 {strides = array<i32>} : memref<64x32xf32, #tpu.memory_space<vmem>>, vector<8x32xf32>,
    %c4_i32 = arith.constant 4 : i32
    %c8_i32_30 = arith.constant 8 : i32
    %102 = arith.muli %c4_i32, %c8_i32_30 : i32
    %103 = tpu.assume_multiple %102, 8 : i32
    %104 = arith.index_cast %103 : i32 to index
    %c0_31 = arith.constant 0 : index
    %105 = vector.load %arg8[%104, %c0_31] : memref<64x128xf32, #tpu.memory_space<vmem>>, vector<8x128xf32>
    %cst_32 = arith.constant dense<0.000000e+00> : vector<8x128xf32>
    %106 = tpu.matmul %99, %7, %cst_32 {dimension_numbers = #tpu.dot_dimension_numbers<[1], [0], [0], [1], [0, 0, 1, 1], [], []>} : vector<8x32xf32>, vector<32x128xf32>, vector<8x128xf32> -> vector<8x128xf32>
    %107 = arith.addf %105, %106 : vector<8x128xf32>
    %108 = arith.negf %107 : vector<8x128xf32>
    %109 = math.exp %108 : vector<8x128xf32>
    %cst_33 = arith.constant 1.000000e+00 : f32
    %110 = vector.broadcast %cst_33 : f32 to vector<8x128xf32>
    %111 = arith.addf %110, %109 : vector<8x128xf32>
    %112 = arith.divf %110, %111 : vector<8x128xf32>
    %113 = vector.extract_strided_slice %112 {offsets = [0, 0], sizes = [8, 32], strides = [1, 1]} : vector<8x128xf32> to vector<8x32xf32>
    %114 = vector.extract_strided_slice %112 {offsets = [0, 32], sizes = [8, 32], strides = [1, 1]} : vector<8x128xf32> to vector<8x32xf32>
    %115 = vector.extract_strided_slice %107 {offsets = [0, 64], sizes = [8, 32], strides = [1, 1]} : vector<8x128xf32> to vector<8x32xf32>
    %116 = math.tanh %115 : vector<8x32xf32>
    %117 = vector.extract_strided_slice %112 {offsets = [0, 96], sizes = [8, 32], strides = [1, 1]} : vector<8x128xf32> to vector<8x32xf32>
    %118 = arith.mulf %114, %97 : vector<8x32xf32>
    %119 = arith.mulf %113, %116 : vector<8x32xf32>
    %120 = arith.addf %118, %119 : vector<8x32xf32>
    %121 = math.tanh %120 : vector<8x32xf32>
    %122 = arith.mulf %117, %121 : vector<8x32xf32>
    %123 = arith.index_cast %103 : i32 to index
    %c0_34 = arith.constant 0 : index
    %124 = vector.load %arg9[%123, %c0_34] : memref<64x32xf32, #tpu.memory_space<vmem>>, vector<8x32xf32>
    tpu.vector_store %arg9[%123, %c0_34], %122 {strides = array<i32>} : memref<64x32xf32, #tpu.memory_space<vmem>>, vector<8x32xf32>,
    %c5_i32 = arith.constant 5 : i32
    %c8_i32_35 = arith.constant 8 : i32
    %125 = arith.muli %c5_i32, %c8_i32_35 : i32
    %126 = tpu.assume_multiple %125, 8 : i32
    %127 = arith.index_cast %126 : i32 to index
    %c0_36 = arith.constant 0 : index
    %128 = vector.load %arg8[%127, %c0_36] : memref<64x128xf32, #tpu.memory_space<vmem>>, vector<8x128xf32>
    %cst_37 = arith.constant dense<0.000000e+00> : vector<8x128xf32>
    %129 = tpu.matmul %122, %7, %cst_37 {dimension_numbers = #tpu.dot_dimension_numbers<[1], [0], [0], [1], [0, 0, 1, 1], [], []>} : vector<8x32xf32>, vector<32x128xf32>, vector<8x128xf32> -> vector<8x128xf32>
    %130 = arith.addf %128, %129 : vector<8x128xf32>
    %131 = arith.negf %130 : vector<8x128xf32>
    %132 = math.exp %131 : vector<8x128xf32>
    %cst_38 = arith.constant 1.000000e+00 : f32
    %133 = vector.broadcast %cst_38 : f32 to vector<8x128xf32>
    %134 = arith.addf %133, %132 : vector<8x128xf32>
    %135 = arith.divf %133, %134 : vector<8x128xf32>
    %136 = vector.extract_strided_slice %135 {offsets = [0, 0], sizes = [8, 32], strides = [1, 1]} : vector<8x128xf32> to vector<8x32xf32>
    %137 = vector.extract_strided_slice %135 {offsets = [0, 32], sizes = [8, 32], strides = [1, 1]} : vector<8x128xf32> to vector<8x32xf32>
    %138 = vector.extract_strided_slice %130 {offsets = [0, 64], sizes = [8, 32], strides = [1, 1]} : vector<8x128xf32> to vector<8x32xf32>
    %139 = math.tanh %138 : vector<8x32xf32>
    %140 = vector.extract_strided_slice %135 {offsets = [0, 96], sizes = [8, 32], strides = [1, 1]} : vector<8x128xf32> to vector<8x32xf32>
    %141 = arith.mulf %137, %120 : vector<8x32xf32>
    %142 = arith.mulf %136, %139 : vector<8x32xf32>
    %143 = arith.addf %141, %142 : vector<8x32xf32>
    %144 = math.tanh %143 : vector<8x32xf32>
    %145 = arith.mulf %140, %144 : vector<8x32xf32>
    %146 = arith.index_cast %126 : i32 to index
    %c0_39 = arith.constant 0 : index
    %147 = vector.load %arg9[%146, %c0_39] : memref<64x32xf32, #tpu.memory_space<vmem>>, vector<8x32xf32>
    tpu.vector_store %arg9[%146, %c0_39], %145 {strides = array<i32>} : memref<64x32xf32, #tpu.memory_space<vmem>>, vector<8x32xf32>,
    %c6_i32 = arith.constant 6 : i32
    %c8_i32_40 = arith.constant 8 : i32
    %148 = arith.muli %c6_i32, %c8_i32_40 : i32
    %149 = tpu.assume_multiple %148, 8 : i32
    %150 = arith.index_cast %149 : i32 to index
    %c0_41 = arith.constant 0 : index
    %151 = vector.load %arg8[%150, %c0_41] : memref<64x128xf32, #tpu.memory_space<vmem>>, vector<8x128xf32>
    %cst_42 = arith.constant dense<0.000000e+00> : vector<8x128xf32>
    %152 = tpu.matmul %145, %7, %cst_42 {dimension_numbers = #tpu.dot_dimension_numbers<[1], [0], [0], [1], [0, 0, 1, 1], [], []>} : vector<8x32xf32>, vector<32x128xf32>, vector<8x128xf32> -> vector<8x128xf32>
    %153 = arith.addf %151, %152 : vector<8x128xf32>
    %154 = arith.negf %153 : vector<8x128xf32>
    %155 = math.exp %154 : vector<8x128xf32>
    %cst_43 = arith.constant 1.000000e+00 : f32
    %156 = vector.broadcast %cst_43 : f32 to vector<8x128xf32>
    %157 = arith.addf %156, %155 : vector<8x128xf32>
    %158 = arith.divf %156, %157 : vector<8x128xf32>
    %159 = vector.extract_strided_slice %158 {offsets = [0, 0], sizes = [8, 32], strides = [1, 1]} : vector<8x128xf32> to vector<8x32xf32>
    %160 = vector.extract_strided_slice %158 {offsets = [0, 32], sizes = [8, 32], strides = [1, 1]} : vector<8x128xf32> to vector<8x32xf32>
    %161 = vector.extract_strided_slice %153 {offsets = [0, 64], sizes = [8, 32], strides = [1, 1]} : vector<8x128xf32> to vector<8x32xf32>
    %162 = math.tanh %161 : vector<8x32xf32>
    %163 = vector.extract_strided_slice %158 {offsets = [0, 96], sizes = [8, 32], strides = [1, 1]} : vector<8x128xf32> to vector<8x32xf32>
    %164 = arith.mulf %160, %143 : vector<8x32xf32>
    %165 = arith.mulf %159, %162 : vector<8x32xf32>
    %166 = arith.addf %164, %165 : vector<8x32xf32>
    %167 = math.tanh %166 : vector<8x32xf32>
    %168 = arith.mulf %163, %167 : vector<8x32xf32>
    %169 = arith.index_cast %149 : i32 to index
    %c0_44 = arith.constant 0 : index
    %170 = vector.load %arg9[%169, %c0_44] : memref<64x32xf32, #tpu.memory_space<vmem>>, vector<8x32xf32>
    tpu.vector_store %arg9[%169, %c0_44], %168 {strides = array<i32>} : memref<64x32xf32, #tpu.memory_space<vmem>>, vector<8x32xf32>,
    %c7_i32 = arith.constant 7 : i32
    %c8_i32_45 = arith.constant 8 : i32
    %171 = arith.muli %c7_i32, %c8_i32_45 : i32
    %172 = tpu.assume_multiple %171, 8 : i32
    %173 = arith.index_cast %172 : i32 to index
    %c0_46 = arith.constant 0 : index
    %174 = vector.load %arg8[%173, %c0_46] : memref<64x128xf32, #tpu.memory_space<vmem>>, vector<8x128xf32>
    %cst_47 = arith.constant dense<0.000000e+00> : vector<8x128xf32>
    %175 = tpu.matmul %168, %7, %cst_47 {dimension_numbers = #tpu.dot_dimension_numbers<[1], [0], [0], [1], [0, 0, 1, 1], [], []>} : vector<8x32xf32>, vector<32x128xf32>, vector<8x128xf32> -> vector<8x128xf32>
    %176 = arith.addf %174, %175 : vector<8x128xf32>
    %177 = arith.negf %176 : vector<8x128xf32>
    %178 = math.exp %177 : vector<8x128xf32>
    %cst_48 = arith.constant 1.000000e+00 : f32
    %179 = vector.broadcast %cst_48 : f32 to vector<8x128xf32>
    %180 = arith.addf %179, %178 : vector<8x128xf32>
    %181 = arith.divf %179, %180 : vector<8x128xf32>
    %182 = vector.extract_strided_slice %181 {offsets = [0, 0], sizes = [8, 32], strides = [1, 1]} : vector<8x128xf32> to vector<8x32xf32>
    %183 = vector.extract_strided_slice %181 {offsets = [0, 32], sizes = [8, 32], strides = [1, 1]} : vector<8x128xf32> to vector<8x32xf32>
    %184 = vector.extract_strided_slice %176 {offsets = [0, 64], sizes = [8, 32], strides = [1, 1]} : vector<8x128xf32> to vector<8x32xf32>
    %185 = math.tanh %184 : vector<8x32xf32>
    %186 = vector.extract_strided_slice %181 {offsets = [0, 96], sizes = [8, 32], strides = [1, 1]} : vector<8x128xf32> to vector<8x32xf32>
    %187 = arith.mulf %183, %166 : vector<8x32xf32>
    %188 = arith.mulf %182, %185 : vector<8x32xf32>
    %189 = arith.addf %187, %188 : vector<8x32xf32>
    %190 = math.tanh %189 : vector<8x32xf32>
    %191 = arith.mulf %186, %190 : vector<8x32xf32>
    %192 = arith.index_cast %172 : i32 to index
    %c0_49 = arith.constant 0 : index
    %193 = vector.load %arg9[%192, %c0_49] : memref<64x32xf32, #tpu.memory_space<vmem>>, vector<8x32xf32>
    tpu.vector_store %arg9[%192, %c0_49], %191 {strides = array<i32>} : memref<64x32xf32, #tpu.memory_space<vmem>>, vector<8x32xf32>,
    %c8_i32_50 = arith.constant 8 : i32
    %c0_51 = arith.constant 0 : index
    %c0_52 = arith.constant 0 : index
    %194 = vector.load %arg9[%c0_51, %c0_52] : memref<64x32xf32, #tpu.memory_space<vmem>>, vector<64x32xf32>
    %c0_53 = arith.constant 0 : index
    %c0_54 = arith.constant 0 : index
    %195 = vector.load %arg5[%c0_53, %c0_54] : memref<32x128xf32, #tpu.memory_space<vmem>>, vector<32x128xf32>
    %cst_55 = arith.constant dense<0.000000e+00> : vector<64x128xf32>
    %196 = tpu.matmul %194, %195, %cst_55 {dimension_numbers = #tpu.dot_dimension_numbers<[1], [0], [0], [1], [0, 0, 1, 1], [], []>} : vector<64x32xf32>, vector<32x128xf32>, vector<64x128xf32> -> vector<64x128xf32>
    %c0_56 = arith.constant 0 : index
    %c0_57 = arith.constant 0 : index
    %197 = vector.load %arg6[%c0_56, %c0_57] : memref<1x128xf32, #tpu.memory_space<vmem>>, vector<1x128xf32>
    %198 = vector.broadcast %197 : vector<1x128xf32> to vector<64x128xf32>
    %199 = arith.addf %196, %198 : vector<64x128xf32>
    %200 = tpu.iota {dimensions = array<i32: 1>} : vector<64x128xi32>
    %c8_i32_58 = arith.constant 8 : i32
    %201 = vector.broadcast %c8_i32_58 : i32 to vector<64x128xi32>
    %202 = arith.cmpi slt, %200, %201 : vector<64x128xi32>
    %cst_59 = arith.constant -1.000000e+30 : f32
    %203 = vector.broadcast %cst_59 : f32 to vector<64x128xf32>
    %204 = arith.select %202, %199, %203 : vector<64x128xi1>, vector<64x128xf32>
    %cst_60 = arith.constant dense<0xFF800000> : vector<64xf32>
    %205 = vector.multi_reduction <maximumf>, %204, %cst_60 [1] : vector<64x128xf32> to vector<64xf32>
    %206 = vector.shape_cast %205 : vector<64xf32> to vector<64x1xf32>
    %207 = vector.broadcast %206 : vector<64x1xf32> to vector<64x128xf32>
    %208 = arith.subf %204, %207 : vector<64x128xf32>
    %209 = math.exp %208 : vector<64x128xf32>
    %cst_61 = arith.constant dense<0.000000e+00> : vector<64xf32>
    %210 = vector.multi_reduction <add>, %209, %cst_61 [1] : vector<64x128xf32> to vector<64xf32>
    %211 = vector.shape_cast %210 : vector<64xf32> to vector<64x1xf32>
    %212 = math.log %211 : vector<64x1xf32>
    %213 = vector.broadcast %212 : vector<64x1xf32> to vector<64x128xf32>
    %214 = arith.subf %208, %213 : vector<64x128xf32>
    %c0_62 = arith.constant 0 : index
    %c0_63 = arith.constant 0 : index
    %215 = vector.load %arg7[%c0_62, %c0_63] : memref<64x128xf32, #tpu.memory_space<vmem>>, vector<64x128xf32>
    tpu.vector_store %arg7[%c0_62, %c0_63], %214 {strides = array<i32>} : memref<64x128xf32, #tpu.memory_space<vmem>>, vector<64x128xf32>,
    return
  }
  func.func @transform_0(%arg0: i32) -> (i32, i32) {
    %c0_i32 = arith.constant 0 : i32
    %c0_i32_0 = arith.constant 0 : i32
    %c0_i32_1 = arith.constant 0 : i32
    return %c0_i32, %c0_i32_0 : i32, i32
  }
  func.func @transform_1(%arg0: i32) -> (i32, i32) {
    %c0_i32 = arith.constant 0 : i32
    %c0_i32_0 = arith.constant 0 : i32
    %c0_i32_1 = arith.constant 0 : i32
    return %c0_i32, %c0_i32_0 : i32, i32
  }
  func.func @transform_2(%arg0: i32) -> (i32, i32) {
    %c0_i32 = arith.constant 0 : i32
    %c0_i32_0 = arith.constant 0 : i32
    %c0_i32_1 = arith.constant 0 : i32
    return %c0_i32, %c0_i32_0 : i32, i32
  }
  func.func @transform_3(%arg0: i32) -> (i32, i32) {
    %c0_i32 = arith.constant 0 : i32
    %c0_i32_0 = arith.constant 0 : i32
    %c0_i32_1 = arith.constant 0 : i32
    return %c0_i32, %c0_i32_0 : i32, i32
  }
  func.func @transform_4(%arg0: i32) -> (i32, i32) {
    %c0_i32 = arith.constant 0 : i32
    %c0_i32_0 = arith.constant 0 : i32
    %c0_i32_1 = arith.constant 0 : i32
    return %c0_i32, %c0_i32_0 : i32, i32
  }
  func.func @transform_5(%arg0: i32) -> (i32, i32) {
    %c0_i32 = arith.constant 0 : i32
    %c0_i32_0 = arith.constant 0 : i32
    %c0_i32_1 = arith.constant 0 : i32
    return %c0_i32, %c0_i32_0 : i32, i32
  }
  func.func @transform_6(%arg0: i32) -> (i32, i32) {
    %c0_i32 = arith.constant 0 : i32
    %c0_i32_0 = arith.constant 0 : i32
    %c0_i32_1 = arith.constant 0 : i32
    return %c0_i32, %c0_i32_0 : i32, i32
  }
}

</mosaic_0001>

<llo_original>
// kernel: tpu_custom_call.1
$region0: #{tpu_custom_call.1}
  #allocation0 [shape = 'u32[]', space=smem, size = 0x4, offset = 0x4, fixed_abs, tag = 'smem constant byte address 0x4 - core index']
  #allocation1 [shape = 'u32[144,128]{1,0:T(1,128)}', space=vmem, size = 0x12000, scoped, tag = 'internal scratch']
  #allocation2 [shape = 'f32[64,128]{1,0:T(8,128)}', space=vmem, size = 0x8000, scoped, tag = 'scratch operand']
  #allocation3 [shape = 'f32[64,32]{1,0:T(8,128)}', space=vmem, size = 0x8000, scoped, tag = 'scratch operand']
  %s0 = inlined_call_operand.vmem [shape: f32[64,16], index: 0, kind: input, shape index: {}]
  %s1 = inlined_call_operand.vmem [shape: f32[16,128], index: 1, kind: input, shape index: {}]
  %s2 = inlined_call_operand.vmem [shape: f32[32,128], index: 2, kind: input, shape index: {}]
  %s3 = inlined_call_operand.vmem [shape: f32[1,128], index: 3, kind: input, shape index: {}]
  %s4 = inlined_call_operand.vmem [shape: f32[32,128], index: 4, kind: input, shape index: {}]
  %s5 = inlined_call_operand.vmem [shape: f32[1,128], index: 5, kind: input, shape index: {}]
  %s6 = inlined_call_operand.hbm [shape: f32[64,128], index: 6, kind: output, shape index: {}]
  %s7 = sld [smem:[#allocation0]]
  $region34: #{tpu_custom_call.1} parent=0
    _
  %s9 = ssub.s32 1, %s7
  %s10 = scalar_select 0, %s9, %s7
  $region1: #{tpu_custom_call.1} parent=0
    #allocation4 [shape = 'u8[32768]{0}', space=vmem, size = 0x8000, scoped, tag = 'output window, operand 0, single buffered']
    #allocation5 [shape = 's32[1]{0}', space=sflag, size = 0x4, scoped, tag = 'scoped memory for tpu_custom_call.1']
    %11 = vsyncpa [#allocation5], 0
    // Predicated region
    $region2: #{tpu_custom_call.1} parent=1 // pred_check
      _
    $region3: #{tpu_custom_call.1} parent=1 // pred_check_branch
      %13 = sbr.rel (0) target = $region5
    $region4: #{tpu_custom_call.1} parent=1 // pred_region
      _
    $region5: #{tpu_custom_call.1} parent=1 // pred_fallthru
      _
    // Predicated region
    $region6: #{tpu_custom_call.1} parent=1 // pred_check
      _
    $region7: #{tpu_custom_call.1} parent=1 // pred_check_branch
      %15 = sbr.rel (0) target = $region9
    $region8: #{tpu_custom_call.1} parent=1 // pred_region
      _
    $region9: #{tpu_custom_call.1} parent=1 // pred_fallthru
      _
    // Predicated region
    $region10: #{tpu_custom_call.1} parent=1 // pred_check
      _
    $region11: #{tpu_custom_call.1} parent=1 // pred_check_branch
      %17 = sbr.rel (0) target = $region13
    $region12: #{tpu_custom_call.1} parent=1 // pred_region
      _
    $region13: #{tpu_custom_call.1} parent=1 // pred_fallthru
      _
    // Predicated region
    $region14: #{tpu_custom_call.1} parent=1 // pred_check
      _
    $region15: #{tpu_custom_call.1} parent=1 // pred_check_branch
      %19 = sbr.rel (0) target = $region17
    $region16: #{tpu_custom_call.1} parent=1 // pred_region
      _
    $region17: #{tpu_custom_call.1} parent=1 // pred_fallthru
      _
    // Predicated region
    $region18: #{tpu_custom_call.1} parent=1 // pred_check
      _
    $region19: #{tpu_custom_call.1} parent=1 // pred_check_branch
      %21 = sbr.rel (0) target = $region21
    $region20: #{tpu_custom_call.1} parent=1 // pred_region
      _
    $region21: #{tpu_custom_call.1} parent=1 // pred_fallthru
      _
    // Predicated region
    $region22: #{tpu_custom_call.1} parent=1 // pred_check
      _
    $region23: #{tpu_custom_call.1} parent=1 // pred_check_branch
      %23 = sbr.rel (0) target = $region25
    $region24: #{tpu_custom_call.1} parent=1 // pred_region
      _
    $region25: #{tpu_custom_call.1} parent=1 // pred_fallthru
      _
    %v24 = vld [vmem:[%s0] sm:$0xff]
    %v25 = vld [vmem:[%s0 + $0x8] sm:$0xff]
    %v26 = vld [vmem:[%s0 + $0x10] sm:$0xff]
    %v27 = vld [vmem:[%s0 + $0x18] sm:$0xff]
    %v28 = vld [vmem:[%s0 + $0x20] sm:$0xff]
    %v29 = vld [vmem:[%s0 + $0x28] sm:$0xff]
    %v30 = vld [vmem:[%s0 + $0x30] sm:$0xff]
    %v31 = vld [vmem:[%s0 + $0x38] sm:$0xff]
    %v32 = vld [vmem:[%s1] sm:$0xff]
    %v33 = vld [vmem:[%s1 + $0x8] sm:$0xff]
    %v34 = vld [vmem:[%s3] sm:$0x1]
    %v36 = vlaneseq
    %v37 = vshrl.u32 %v36, 7
    %v38 = vsub.s32 0, %v37
    %v39 = vrot.slane %v34, %v38
    %vm41 = vcmask 130048
    %v43 = vsel %vm41, %v24, 0
    %v46 = vsel %vm41, %v25, 0
    %v49 = vsel %vm41, %v26, 0
    %v52 = vsel %vm41, %v27, 0
    %v55 = vsel %vm41, %v28, 0
    %v58 = vsel %vm41, %v29, 0
    %v61 = vsel %vm41, %v30, 0
    %v64 = vsel %vm41, %v31, 0
    %66 = vmatprep.subr.mxu0 0.0
    %67 = vmatpush1.msra.mxu0 0.0
    %68 = vmatprep.subr.mxu0 0.0
    %69 = vmatpush1.msra.mxu0 0.0
    %70 = vmatprep.subr.mxu0 0.0
    %71 = vmatpush1.msra.mxu0 0.0
    %72 = vmatprep.subr.mxu0 0.0
    %73 = vmatpush1.msra.mxu0 0.0
    %74 = vmatprep.subr.mxu0 0.0
    %75 = vmatpush1.msra.mxu0 0.0
    %76 = vmatprep.subr.mxu0 0.0
    %77 = vmatpush1.msra.mxu0 0.0
    %78 = vmatprep.subr.mxu0 0.0
    %79 = vmatpush1.msra.mxu0 0.0
    %80 = vmatprep.subr.mxu0 0.0
    %81 = vmatpush1.msra.mxu0 0.0
    %82 = vmatprep.subr.mxu0 0.0
    %83 = vmatpush1.msra.mxu0 0.0
    %84 = vmatprep.subr.mxu0 0.0
    %85 = vmatpush1.msra.mxu0 0.0
    %86 = vmatprep.subr.mxu0 0.0
    %87 = vmatpush1.msra.mxu0 0.0
    %88 = vmatprep.subr.mxu0 0.0
    %89 = vmatpush1.msra.mxu0 0.0
    %90 = vmatprep.subr.mxu0 0.0
    %91 = vmatpush1.msra.mxu0 0.0
    %92 = vmatprep.subr.mxu0 0.0
    %93 = vmatpush1.msra.mxu0 0.0
    %94 = vmatprep.subr.mxu0 0.0
    %95 = vmatpush1.msra.mxu0 %v33
    %96 = vmatprep.subr.mxu0 0.0
    %97 = vmatpush1.msra.mxu0 %v32
    %98 = vmatprep.subr.mxu0 0.0
    %99 = vmatpush2.msra.mxu0 0.0
    %100 = vmatprep.subr.mxu0 0.0
    %101 = vmatpush2.msra.mxu0 0.0
    %102 = vmatprep.subr.mxu0 0.0
    %103 = vmatpush2.msra.mxu0 0.0
    %104 = vmatprep.subr.mxu0 0.0
    %105 = vmatpush2.msra.mxu0 0.0
    %106 = vmatprep.subr.mxu0 0.0
    %107 = vmatpush2.msra.mxu0 0.0
    %108 = vmatprep.subr.mxu0 0.0
    %109 = vmatpush2.msra.mxu0 0.0
    %110 = vmatprep.subr.mxu0 0.0
    %111 = vmatpush2.msra.mxu0 0.0
    %112 = vmatprep.subr.mxu0 0.0
    %113 = vmatpush2.msra.mxu0 0.0
    %114 = vmatprep.subr.mxu0 0.0
    %115 = vmatpush2.msra.mxu0 0.0
    %116 = vmatprep.subr.mxu0 0.0
    %117 = vmatpush2.msra.mxu0 0.0
    %118 = vmatprep.subr.mxu0 0.0
    %119 = vmatpush2.msra.mxu0 0.0
    %120 = vmatprep.subr.mxu0 0.0
    %121 = vmatpush2.msra.mxu0 0.0
    %122 = vmatprep.subr.mxu0 0.0
    %123 = vmatpush2.msra.mxu0 0.0
    %124 = vmatprep.subr.mxu0 0.0
    %125 = vmatpush2.msra.mxu0 0.0
    %126 = vmatprep.subr.mxu0 0.0
    %127 = vmatpush2.msra.mxu0 0.0
    %128 = vmatprep.subr.mxu0 0.0
    %129 = vmatpush2.msra.mxu0 0.0
    %130 = vmatprep.mubr.f32.mxu0 0.0
    %131 = vmatmul.mubr.f32.gmra.mxu0 %v43
    %v132 = vpop.f32.mrf.mxu0
    %v133 = vadd.f32 %v39, %v132
    %v134 = vpop.f32.mrf.mxu0
    %135 = vmatprep.mubr.f32.mxu0 0.0
    %136 = vmatmul.mubr.f32.gmra.mxu0 %v46
    %v137 = vpop.f32.mrf.mxu0
    %v138 = vadd.f32 %v39, %v137
    %v139 = vpop.f32.mrf.mxu0
    %140 = vmatprep.mubr.f32.mxu0 0.0
    %141 = vmatmul.mubr.f32.gmra.mxu0 %v49
    %v142 = vpop.f32.mrf.mxu0
    %v143 = vadd.f32 %v39, %v142
    %v144 = vpop.f32.mrf.mxu0
    %145 = vmatprep.mubr.f32.mxu0 0.0
    %146 = vmatmul.mubr.f32.gmra.mxu0 %v52
    %v147 = vpop.f32.mrf.mxu0
    %v148 = vadd.f32 %v39, %v147
    %v149 = vpop.f32.mrf.mxu0
    %150 = vmatprep.mubr.f32.mxu0 0.0
    %151 = vmatmul.mubr.f32.gmra.mxu0 %v55
    %v152 = vpop.f32.mrf.mxu0
    %v153 = vadd.f32 %v39, %v152
    %v154 = vpop.f32.mrf.mxu0
    %155 = vmatprep.mubr.f32.mxu0 0.0
    %156 = vmatmul.mubr.f32.gmra.mxu0 %v58
    %v157 = vpop.f32.mrf.mxu0
    %v158 = vadd.f32 %v39, %v157
    %v159 = vpop.f32.mrf.mxu0
    %160 = vmatprep.mubr.f32.mxu0 0.0
    %161 = vmatmul.mubr.f32.gmra.mxu0 %v61
    %v162 = vpop.f32.mrf.mxu0
    %v163 = vadd.f32 %v39, %v162
    %v164 = vpop.f32.mrf.mxu0
    %165 = vmatprep.mubr.f32.mxu0 0.0
    %166 = vmatmul.mubr.f32.gmra.mxu0 %v64
    %v167 = vpop.f32.mrf.mxu0
    %v168 = vadd.f32 %v39, %v167
    %v169 = vpop.f32.mrf.mxu0
    %170 = vdwg.mxu0
    %171 = vst [vmem:[#allocation2] sm:$0xff] %v133
    %172 = vst [vmem:[#allocation2 + $0x8] sm:$0xff] %v138
    %173 = vst [vmem:[#allocation2 + $0x10] sm:$0xff] %v143
    %174 = vst [vmem:[#allocation2 + $0x18] sm:$0xff] %v148
    %175 = vst [vmem:[#allocation2 + $0x20] sm:$0xff] %v153
    %176 = vst [vmem:[#allocation2 + $0x28] sm:$0xff] %v158
    %177 = vst [vmem:[#allocation2 + $0x30] sm:$0xff] %v163
    %178 = vst [vmem:[#allocation2 + $0x38] sm:$0xff] %v168
    %v179 = vld [vmem:[%s2] sm:$0xff]
    %v180 = vld [vmem:[%s2 + $0x8] sm:$0xff]
    %v181 = vld [vmem:[%s2 + $0x10] sm:$0xff]
    %v182 = vld [vmem:[%s2 + $0x18] sm:$0xff]
    %v183 = vld [vmem:[#allocation2] sm:$0xff]
    %vm184 = vcmask 261120
    %v186 = vsel %vm184, 0.0, 0
    %188 = vmatprep.subr.mxu0 0.0
    %189 = vmatpush1.msra.mxu0 0.0
    %190 = vmatprep.subr.mxu0 0.0
    %191 = vmatpush1.msra.mxu0 0.0
    %192 = vmatprep.subr.mxu0 0.0
    %193 = vmatpush1.msra.mxu0 0.0
    %194 = vmatprep.subr.mxu0 0.0
    %195 = vmatpush1.msra.mxu0 0.0
    %196 = vmatprep.subr.mxu0 0.0
    %197 = vmatpush1.msra.mxu0 0.0
    %198 = vmatprep.subr.mxu0 0.0
    %199 = vmatpush1.msra.mxu0 0.0
    %200 = vmatprep.subr.mxu0 0.0
    %201 = vmatpush1.msra.mxu0 0.0
    %202 = vmatprep.subr.mxu0 0.0
    %203 = vmatpush1.msra.mxu0 0.0
    %204 = vmatprep.subr.mxu0 0.0
    %205 = vmatpush1.msra.mxu0 0.0
    %206 = vmatprep.subr.mxu0 0.0
    %207 = vmatpush1.msra.mxu0 0.0
    %208 = vmatprep.subr.mxu0 0.0
    %209 = vmatpush1.msra.mxu0 0.0
    %210 = vmatprep.subr.mxu0 0.0
    %211 = vmatpush1.msra.mxu0 0.0
    %212 = vmatprep.subr.mxu0 0.0
    %213 = vmatpush1.msra.mxu0 %v182
    %214 = vmatprep.subr.mxu0 0.0
    %215 = vmatpush1.msra.mxu0 %v181
    %216 = vmatprep.subr.mxu0 0.0
    %217 = vmatpush1.msra.mxu0 %v180
    %218 = vmatprep.subr.mxu0 0.0
    %219 = vmatpush1.msra.mxu0 %v179
    %220 = vmatprep.subr.mxu0 0.0
    %221 = vmatpush2.msra.mxu0 0.0
    %222 = vmatprep.subr.mxu0 0.0
    %223 = vmatpush2.msra.mxu0 0.0
    %224 = vmatprep.subr.mxu0 0.0
    %225 = vmatpush2.msra.mxu0 0.0
    %226 = vmatprep.subr.mxu0 0.0
    %227 = vmatpush2.msra.mxu0 0.0
    %228 = vmatprep.subr.mxu0 0.0
    %229 = vmatpush2.msra.mxu0 0.0
    %230 = vmatprep.subr.mxu0 0.0
    %231 = vmatpush2.msra.mxu0 0.0
    %232 = vmatprep.subr.mxu0 0.0
    %233 = vmatpush2.msra.mxu0 0.0
    %234 = vmatprep.subr.mxu0 0.0
    %235 = vmatpush2.msra.mxu0 0.0
    %236 = vmatprep.subr.mxu0 0.0
    %237 = vmatpush2.msra.mxu0 0.0
    %238 = vmatprep.subr.mxu0 0.0
    %239 = vmatpush2.msra.mxu0 0.0
    %240 = vmatprep.subr.mxu0 0.0
    %241 = vmatpush2.msra.mxu0 0.0
    %242 = vmatprep.subr.mxu0 0.0
    %243 = vmatpush2.msra.mxu0 0.0
    %244 = vmatprep.subr.mxu0 0.0
    %245 = vmatpush2.msra.mxu0 0.0
    %246 = vmatprep.subr.mxu0 0.0
    %247 = vmatpush2.msra.mxu0 0.0
    %248 = vmatprep.subr.mxu0 0.0
    %249 = vmatpush2.msra.mxu0 0.0
    %250 = vmatprep.subr.mxu0 0.0
    %251 = vmatpush2.msra.mxu0 0.0
    %252 = vmatprep.mubr.f32.mxu0 0.0
    %253 = vmatmul.mubr.f32.gmra.mxu0 %v186
    %v254 = vpop.f32.mrf.mxu0
    %v255 = vadd.f32 0.0, %v254
    %v256 = vpop.f32.mrf.mxu0
    %257 = vdwg.mxu0
    %v258 = vadd.f32 %v183, %v255
    %v259 = vxor.u32 %v258, 2147483648
    %v260 = vmul.f32 %v259, 1.442695
    %v261 = vpow.pop %v260
    %v262 = vadd.f32 %v261, 1.0
    %v263 = vrcp.pop %v262
    %v264 = vmul.f32 1.0, %v263
    %v265 = vtanh.pop %v258
    %v266 = vmul.f32 %v264, 0.0
    %268 = vrot.lane.b32.xlu0 %v265, 64
    %v269 = vpop.permute.xlu0 %268
    %v271 = vmul.f32 %v264, %v269
    %273 = vrot.lane.b32.xlu0 %v271, 32
    %v274 = vpop.permute.xlu0 %273
    %v276 = vadd.f32 %v266, %v274
    %v277 = vtanh.pop %v276
    %279 = vrot.lane.b32.xlu0 %v277, 64
    %v280 = vpop.permute.xlu0 %279
    %v282 = vmul.f32 %v264, %v280
    %284 = vrot.lane.b32.xlu0 %v282, 32
    %v285 = vpop.permute.xlu0 %284
    %287 = vst.msk [vmem:[#allocation3] sm:$0xff] %vm184, %v285
    %s288 = scalar_lea.vmem [#allocation2], 8
    %v289 = vld [vmem:[%s288] sm:$0xff]
    %v290 = vsel %vm184, %v285, 0
    %292 = vmatprep.subr.mxu0 0.0
    %293 = vmatpush1.msra.mxu0 0.0
    %294 = vmatprep.subr.mxu0 0.0
    %295 = vmatpush1.msra.mxu0 0.0
    %296 = vmatprep.subr.mxu0 0.0
    %297 = vmatpush1.msra.mxu0 0.0
    %298 = vmatprep.subr.mxu0 0.0
    %299 = vmatpush1.msra.mxu0 0.0
    %300 = vmatprep.subr.mxu0 0.0
    %301 = vmatpush1.msra.mxu0 0.0
    %302 = vmatprep.subr.mxu0 0.0
    %303 = vmatpush1.msra.mxu0 0.0
    %304 = vmatprep.subr.mxu0 0.0
    %305 = vmatpush1.msra.mxu0 0.0
    %306 = vmatprep.subr.mxu0 0.0
    %307 = vmatpush1.msra.mxu0 0.0
    %308 = vmatprep.subr.mxu0 0.0
    %309 = vmatpush1.msra.mxu0 0.0
    %310 = vmatprep.subr.mxu0 0.0
    %311 = vmatpush1.msra.mxu0 0.0
    %312 = vmatprep.subr.mxu0 0.0
    %313 = vmatpush1.msra.mxu0 0.0
    %314 = vmatprep.subr.mxu0 0.0
    %315 = vmatpush1.msra.mxu0 0.0
    %316 = vmatprep.subr.mxu0 0.0
    %317 = vmatpush1.msra.mxu0 %v182
    %318 = vmatprep.subr.mxu0 0.0
    %319 = vmatpush1.msra.mxu0 %v181
    %320 = vmatprep.subr.mxu0 0.0
    %321 = vmatpush1.msra.mxu0 %v180
    %322 = vmatprep.subr.mxu0 0.0
    %323 = vmatpush1.msra.mxu0 %v179
    %324 = vmatprep.subr.mxu0 0.0
    %325 = vmatpush2.msra.mxu0 0.0
    %326 = vmatprep.subr.mxu0 0.0
    %327 = vmatpush2.msra.mxu0 0.0
    %328 = vmatprep.subr.mxu0 0.0
    %329 = vmatpush2.msra.mxu0 0.0
    %330 = vmatprep.subr.mxu0 0.0
    %331 = vmatpush2.msra.mxu0 0.0
    %332 = vmatprep.subr.mxu0 0.0
    %333 = vmatpush2.msra.mxu0 0.0
    %334 = vmatprep.subr.mxu0 0.0
    %335 = vmatpush2.msra.mxu0 0.0
    %336 = vmatprep.subr.mxu0 0.0
    %337 = vmatpush2.msra.mxu0 0.0
    %338 = vmatprep.subr.mxu0 0.0
    %339 = vmatpush2.msra.mxu0 0.0
    %340 = vmatprep.subr.mxu0 0.0
    %341 = vmatpush2.msra.mxu0 0.0
    %342 = vmatprep.subr.mxu0 0.0
    %343 = vmatpush2.msra.mxu0 0.0
    %344 = vmatprep.subr.mxu0 0.0
    %345 = vmatpush2.msra.mxu0 0.0
    %346 = vmatprep.subr.mxu0 0.0
    %347 = vmatpush2.msra.mxu0 0.0
    %348 = vmatprep.subr.mxu0 0.0
    %349 = vmatpush2.msra.mxu0 0.0
    %350 = vmatprep.subr.mxu0 0.0
    %351 = vmatpush2.msra.mxu0 0.0
    %352 = vmatprep.subr.mxu0 0.0
    %353 = vmatpush2.msra.mxu0 0.0
    %354 = vmatprep.subr.mxu0 0.0
    %355 = vmatpush2.msra.mxu0 0.0
    %356 = vmatprep.mubr.f32.mxu0 0.0
    %357 = vmatmul.mubr.f32.gmra.mxu0 %v290
    %v358 = vpop.f32.mrf.mxu0
    %v359 = vadd.f32 0.0, %v358
    %v360 = vpop.f32.mrf.mxu0
    %361 = vdwg.mxu0
    %v362 = vadd.f32 %v289, %v359
    %v363 = vxor.u32 %v362, 2147483648
    %v364 = vmul.f32 %v363, 1.442695
    %v365 = vpow.pop %v364
    %v366 = vadd.f32 %v365, 1.0
    %v367 = vrcp.pop %v366
    %v368 = vmul.f32 1.0, %v367
    %v369 = vtanh.pop %v362
    %v370 = vmul.f32 %v368, %v276
    %372 = vrot.lane.b32.xlu0 %v369, 64
    %v373 = vpop.permute.xlu0 %372
    %v375 = vmul.f32 %v368, %v373
    %377 = vrot.lane.b32.xlu0 %v375, 32
    %v378 = vpop.permute.xlu0 %377
    %v380 = vadd.f32 %v370, %v378
    %v381 = vtanh.pop %v380
    %383 = vrot.lane.b32.xlu0 %v381, 64
    %v384 = vpop.permute.xlu0 %383
    %v386 = vmul.f32 %v368, %v384
    %388 = vrot.lane.b32.xlu0 %v386, 32
    %v389 = vpop.permute.xlu0 %388
    %s391 = scalar_lea.vmem [#allocation3], 8
    %392 = vst.msk [vmem:[%s391] sm:$0xff] %vm184, %v389
    %s393 = scalar_lea.vmem [#allocation2], 16
    %v394 = vld [vmem:[%s393] sm:$0xff]
    %v395 = vsel %vm184, %v389, 0
    %397 = vmatprep.subr.mxu0 0.0
    %398 = vmatpush1.msra.mxu0 0.0
    %399 = vmatprep.subr.mxu0 0.0
    %400 = vmatpush1.msra.mxu0 0.0
    %401 = vmatprep.subr.mxu0 0.0
    %402 = vmatpush1.msra.mxu0 0.0
    %403 = vmatprep.subr.mxu0 0.0
    %404 = vmatpush1.msra.mxu0 0.0
    %405 = vmatprep.subr.mxu0 0.0
    %406 = vmatpush1.msra.mxu0 0.0
    %407 = vmatprep.subr.mxu0 0.0
    %408 = vmatpush1.msra.mxu0 0.0
    %409 = vmatprep.subr.mxu0 0.0
    %410 = vmatpush1.msra.mxu0 0.0
    %411 = vmatprep.subr.mxu0 0.0
    %412 = vmatpush1.msra.mxu0 0.0
    %413 = vmatprep.subr.mxu0 0.0
    %414 = vmatpush1.msra.mxu0 0.0
    %415 = vmatprep.subr.mxu0 0.0
    %416 = vmatpush1.msra.mxu0 0.0
    %417 = vmatprep.subr.mxu0 0.0
    %418 = vmatpush1.msra.mxu0 0.0
    %419 = vmatprep.subr.mxu0 0.0
    %420 = vmatpush1.msra.mxu0 0.0
    %421 = vmatprep.subr.mxu0 0.0
    %422 = vmatpush1.msra.mxu0 %v182
    %423 = vmatprep.subr.mxu0 0.0
    %424 = vmatpush1.msra.mxu0 %v181
    %425 = vmatprep.subr.mxu0 0.0
    %426 = vmatpush1.msra.mxu0 %v180
    %427 = vmatprep.subr.mxu0 0.0
    %428 = vmatpush1.msra.mxu0 %v179
    %429 = vmatprep.subr.mxu0 0.0
    %430 = vmatpush2.msra.mxu0 0.0
    %431 = vmatprep.subr.mxu0 0.0
    %432 = vmatpush2.msra.mxu0 0.0
    %433 = vmatprep.subr.mxu0 0.0
    %434 = vmatpush2.msra.mxu0 0.0
    %435 = vmatprep.subr.mxu0 0.0
    %436 = vmatpush2.msra.mxu0 0.0
    %437 = vmatprep.subr.mxu0 0.0
    %438 = vmatpush2.msra.mxu0 0.0
    %439 = vmatprep.subr.mxu0 0.0
    %440 = vmatpush2.msra.mxu0 0.0
    %441 = vmatprep.subr.mxu0 0.0
    %442 = vmatpush2.msra.mxu0 0.0
    %443 = vmatprep.subr.mxu0 0.0
    %444 = vmatpush2.msra.mxu0 0.0
    %445 = vmatprep.subr.mxu0 0.0
    %446 = vmatpush2.msra.mxu0 0.0
    %447 = vmatprep.subr.mxu0 0.0
    %448 = vmatpush2.msra.mxu0 0.0
    %449 = vmatprep.subr.mxu0 0.0
    %450 = vmatpush2.msra.mxu0 0.0
    %451 = vmatprep.subr.mxu0 0.0
    %452 = vmatpush2.msra.mxu0 0.0
    %453 = vmatprep.subr.mxu0 0.0
    %454 = vmatpush2.msra.mxu0 0.0
    %455 = vmatprep.subr.mxu0 0.0
    %456 = vmatpush2.msra.mxu0 0.0
    %457 = vmatprep.subr.mxu0 0.0
    %458 = vmatpush2.msra.mxu0 0.0
    %459 = vmatprep.subr.mxu0 0.0
    %460 = vmatpush2.msra.mxu0 0.0
    %461 = vmatprep.mubr.f32.mxu0 0.0
    %462 = vmatmul.mubr.f32.gmra.mxu0 %v395
    %v463 = vpop.f32.mrf.mxu0
    %v464 = vadd.f32 0.0, %v463
    %v465 = vpop.f32.mrf.mxu0
    %466 = vdwg.mxu0
    %v467 = vadd.f32 %v394, %v464
    %v468 = vxor.u32 %v467, 2147483648
    %v469 = vmul.f32 %v468, 1.442695
    %v470 = vpow.pop %v469
    %v471 = vadd.f32 %v470, 1.0
    %v472 = vrcp.pop %v471
    %v473 = vmul.f32 1.0, %v472
    %v474 = vtanh.pop %v467
    %v475 = vmul.f32 %v473, %v380
    %477 = vrot.lane.b32.xlu0 %v474, 64
    %v478 = vpop.permute.xlu0 %477
    %v480 = vmul.f32 %v473, %v478
    %482 = vrot.lane.b32.xlu0 %v480, 32
    %v483 = vpop.permute.xlu0 %482
    %v485 = vadd.f32 %v475, %v483
    %v486 = vtanh.pop %v485
    %488 = vrot.lane.b32.xlu0 %v486, 64
    %v489 = vpop.permute.xlu0 %488
    %v491 = vmul.f32 %v473, %v489
    %493 = vrot.lane.b32.xlu0 %v491, 32
    %v494 = vpop.permute.xlu0 %493
    %s496 = scalar_lea.vmem [#allocation3], 16
    %497 = vst.msk [vmem:[%s496] sm:$0xff] %vm184, %v494
    %s498 = scalar_lea.vmem [#allocation2], 24
    %v499 = vld [vmem:[%s498] sm:$0xff]
    %v500 = vsel %vm184, %v494, 0
    %502 = vmatprep.subr.mxu0 0.0
    %503 = vmatpush1.msra.mxu0 0.0
    %504 = vmatprep.subr.mxu0 0.0
    %505 = vmatpush1.msra.mxu0 0.0
    %506 = vmatprep.subr.mxu0 0.0
    %507 = vmatpush1.msra.mxu0 0.0
    %508 = vmatprep.subr.mxu0 0.0
    %509 = vmatpush1.msra.mxu0 0.0
    %510 = vmatprep.subr.mxu0 0.0
    %511 = vmatpush1.msra.mxu0 0.0
    %512 = vmatprep.subr.mxu0 0.0
    %513 = vmatpush1.msra.mxu0 0.0
    %514 = vmatprep.subr.mxu0 0.0
    %515 = vmatpush1.msra.mxu0 0.0
    %516 = vmatprep.subr.mxu0 0.0
    %517 = vmatpush1.msra.mxu0 0.0
    %518 = vmatprep.subr.mxu0 0.0
    %519 = vmatpush1.msra.mxu0 0.0
    %520 = vmatprep.subr.mxu0 0.0
    %521 = vmatpush1.msra.mxu0 0.0
    %522 = vmatprep.subr.mxu0 0.0
    %523 = vmatpush1.msra.mxu0 0.0
    %524 = vmatprep.subr.mxu0 0.0
    %525 = vmatpush1.msra.mxu0 0.0
    %526 = vmatprep.subr.mxu0 0.0
    %527 = vmatpush1.msra.mxu0 %v182
    %528 = vmatprep.subr.mxu0 0.0
    %529 = vmatpush1.msra.mxu0 %v181
    %530 = vmatprep.subr.mxu0 0.0
    %531 = vmatpush1.msra.mxu0 %v180
    %532 = vmatprep.subr.mxu0 0.0
    %533 = vmatpush1.msra.mxu0 %v179
    %534 = vmatprep.subr.mxu0 0.0
    %535 = vmatpush2.msra.mxu0 0.0
    %536 = vmatprep.subr.mxu0 0.0
    %537 = vmatpush2.msra.mxu0 0.0
    %538 = vmatprep.subr.mxu0 0.0
    %539 = vmatpush2.msra.mxu0 0.0
    %540 = vmatprep.subr.mxu0 0.0
    %541 = vmatpush2.msra.mxu0 0.0
    %542 = vmatprep.subr.mxu0 0.0
    %543 = vmatpush2.msra.mxu0 0.0
    %544 = vmatprep.subr.mxu0 0.0
    %545 = vmatpush2.msra.mxu0 0.0
    %546 = vmatprep.subr.mxu0 0.0
    %547 = vmatpush2.msra.mxu0 0.0
    %548 = vmatprep.subr.mxu0 0.0
    %549 = vmatpush2.msra.mxu0 0.0
    %550 = vmatprep.subr.mxu0 0.0
    %551 = vmatpush2.msra.mxu0 0.0
    %552 = vmatprep.subr.mxu0 0.0
    %553 = vmatpush2.msra.mxu0 0.0
    %554 = vmatprep.subr.mxu0 0.0
    %555 = vmatpush2.msra.mxu0 0.0
    %556 = vmatprep.subr.mxu0 0.0
    %557 = vmatpush2.msra.mxu0 0.0
    %558 = vmatprep.subr.mxu0 0.0
    %559 = vmatpush2.msra.mxu0 0.0
    %560 = vmatprep.subr.mxu0 0.0
    %561 = vmatpush2.msra.mxu0 0.0
    %562 = vmatprep.subr.mxu0 0.0
    %563 = vmatpush2.msra.mxu0 0.0
    %564 = vmatprep.subr.mxu0 0.0
    %565 = vmatpush2.msra.mxu0 0.0
    %566 = vmatprep.mubr.f32.mxu0 0.0
    %567 = vmatmul.mubr.f32.gmra.mxu0 %v500
    %v568 = vpop.f32.mrf.mxu0
    %v569 = vadd.f32 0.0, %v568
    %v570 = vpop.f32.mrf.mxu0
    %571 = vdwg.mxu0
    %v572 = vadd.f32 %v499, %v569
    %v573 = vxor.u32 %v572, 2147483648
    %v574 = vmul.f32 %v573, 1.442695
    %v575 = vpow.pop %v574
    %v576 = vadd.f32 %v575, 1.0
    %v577 = vrcp.pop %v576
    %v578 = vmul.f32 1.0, %v577
    %v579 = vtanh.pop %v572
    %v580 = vmul.f32 %v578, %v485
    %582 = vrot.lane.b32.xlu0 %v579, 64
    %v583 = vpop.permute.xlu0 %582
    %v585 = vmul.f32 %v578, %v583
    %587 = vrot.lane.b32.xlu0 %v585, 32
    %v588 = vpop.permute.xlu0 %587
    %v590 = vadd.f32 %v580, %v588
    %v591 = vtanh.pop %v590
    %593 = vrot.lane.b32.xlu0 %v591, 64
    %v594 = vpop.permute.xlu0 %593
    %v596 = vmul.f32 %v578, %v594
    %598 = vrot.lane.b32.xlu0 %v596, 32
    %v599 = vpop.permute.xlu0 %598
    %s601 = scalar_lea.vmem [#allocation3], 24
    %602 = vst.msk [vmem:[%s601] sm:$0xff] %vm184, %v599
    %s603 = scalar_lea.vmem [#allocation2], 32
    %v604 = vld [vmem:[%s603] sm:$0xff]
    %v605 = vsel %vm184, %v599, 0
    %607 = vmatprep.subr.mxu0 0.0
    %608 = vmatpush1.msra.mxu0 0.0
    %609 = vmatprep.subr.mxu0 0.0
    %610 = vmatpush1.msra.mxu0 0.0
    %611 = vmatprep.subr.mxu0 0.0
    %612 = vmatpush1.msra.mxu0 0.0
    %613 = vmatprep.subr.mxu0 0.0
    %614 = vmatpush1.msra.mxu0 0.0
    %615 = vmatprep.subr.mxu0 0.0
    %616 = vmatpush1.msra.mxu0 0.0
    %617 = vmatprep.subr.mxu0 0.0
    %618 = vmatpush1.msra.mxu0 0.0
    %619 = vmatprep.subr.mxu0 0.0
    %620 = vmatpush1.msra.mxu0 0.0
    %621 = vmatprep.subr.mxu0 0.0
    %622 = vmatpush1.msra.mxu0 0.0
    %623 = vmatprep.subr.mxu0 0.0
    %624 = vmatpush1.msra.mxu0 0.0
    %625 = vmatprep.subr.mxu0 0.0
    %626 = vmatpush1.msra.mxu0 0.0
    %627 = vmatprep.subr.mxu0 0.0
    %628 = vmatpush1.msra.mxu0 0.0
    %629 = vmatprep.subr.mxu0 0.0
    %630 = vmatpush1.msra.mxu0 0.0
    %631 = vmatprep.subr.mxu0 0.0
    %632 = vmatpush1.msra.mxu0 %v182
    %633 = vmatprep.subr.mxu0 0.0
    %634 = vmatpush1.msra.mxu0 %v181
    %635 = vmatprep.subr.mxu0 0.0
    %636 = vmatpush1.msra.mxu0 %v180
    %637 = vmatprep.subr.mxu0 0.0
    %638 = vmatpush1.msra.mxu0 %v179
    %639 = vmatprep.subr.mxu0 0.0
    %640 = vmatpush2.msra.mxu0 0.0
    %641 = vmatprep.subr.mxu0 0.0
    %642 = vmatpush2.msra.mxu0 0.0
    %643 = vmatprep.subr.mxu0 0.0
    %644 = vmatpush2.msra.mxu0 0.0
    %645 = vmatprep.subr.mxu0 0.0
    %646 = vmatpush2.msra.mxu0 0.0
    %647 = vmatprep.subr.mxu0 0.0
    %648 = vmatpush2.msra.mxu0 0.0
    %649 = vmatprep.subr.mxu0 0.0
    %650 = vmatpush2.msra.mxu0 0.0
    %651 = vmatprep.subr.mxu0 0.0
    %652 = vmatpush2.msra.mxu0 0.0
    %653 = vmatprep.subr.mxu0 0.0
    %654 = vmatpush2.msra.mxu0 0.0
    %655 = vmatprep.subr.mxu0 0.0
    %656 = vmatpush2.msra.mxu0 0.0
    %657 = vmatprep.subr.mxu0 0.0
    %658 = vmatpush2.msra.mxu0 0.0
    %659 = vmatprep.subr.mxu0 0.0
    %660 = vmatpush2.msra.mxu0 0.0
    %661 = vmatprep.subr.mxu0 0.0
    %662 = vmatpush2.msra.mxu0 0.0
    %663 = vmatprep.subr.mxu0 0.0
    %664 = vmatpush2.msra.mxu0 0.0
    %665 = vmatprep.subr.mxu0 0.0
    %666 = vmatpush2.msra.mxu0 0.0
    %667 = vmatprep.subr.mxu0 0.0
    %668 = vmatpush2.msra.mxu0 0.0
    %669 = vmatprep.subr.mxu0 0.0
    %670 = vmatpush2.msra.mxu0 0.0
    %671 = vmatprep.mubr.f32.mxu0 0.0
    %672 = vmatmul.mubr.f32.gmra.mxu0 %v605
    %v673 = vpop.f32.mrf.mxu0
    %v674 = vadd.f32 0.0, %v673
    %v675 = vpop.f32.mrf.mxu0
    %676 = vdwg.mxu0
    %v677 = vadd.f32 %v604, %v674
    %v678 = vxor.u32 %v677, 2147483648
    %v679 = vmul.f32 %v678, 1.442695
    %v680 = vpow.pop %v679
    %v681 = vadd.f32 %v680, 1.0
    %v682 = vrcp.pop %v681
    %v683 = vmul.f32 1.0, %v682
    %v684 = vtanh.pop %v677
    %v685 = vmul.f32 %v683, %v590
    %687 = vrot.lane.b32.xlu0 %v684, 64
    %v688 = vpop.permute.xlu0 %687
    %v690 = vmul.f32 %v683, %v688
    %692 = vrot.lane.b32.xlu0 %v690, 32
    %v693 = vpop.permute.xlu0 %692
    %v695 = vadd.f32 %v685, %v693
    %v696 = vtanh.pop %v695
    %698 = vrot.lane.b32.xlu0 %v696, 64
    %v699 = vpop.permute.xlu0 %698
    %v701 = vmul.f32 %v683, %v699
    %703 = vrot.lane.b32.xlu0 %v701, 32
    %v704 = vpop.permute.xlu0 %703
    %s706 = scalar_lea.vmem [#allocation3], 32
    %707 = vst.msk [vmem:[%s706] sm:$0xff] %vm184, %v704
    %s708 = scalar_lea.vmem [#allocation2], 40
    %v709 = vld [vmem:[%s708] sm:$0xff]
    %v710 = vsel %vm184, %v704, 0
    %712 = vmatprep.subr.mxu0 0.0
    %713 = vmatpush1.msra.mxu0 0.0
    %714 = vmatprep.subr.mxu0 0.0
    %715 = vmatpush1.msra.mxu0 0.0
    %716 = vmatprep.subr.mxu0 0.0
    %717 = vmatpush1.msra.mxu0 0.0
    %718 = vmatprep.subr.mxu0 0.0
    %719 = vmatpush1.msra.mxu0 0.0
    %720 = vmatprep.subr.mxu0 0.0
    %721 = vmatpush1.msra.mxu0 0.0
    %722 = vmatprep.subr.mxu0 0.0
    %723 = vmatpush1.msra.mxu0 0.0
    %724 = vmatprep.subr.mxu0 0.0
    %725 = vmatpush1.msra.mxu0 0.0
    %726 = vmatprep.subr.mxu0 0.0
    %727 = vmatpush1.msra.mxu0 0.0
    %728 = vmatprep.subr.mxu0 0.0
    %729 = vmatpush1.msra.mxu0 0.0
    %730 = vmatprep.subr.mxu0 0.0
    %731 = vmatpush1.msra.mxu0 0.0
    %732 = vmatprep.subr.mxu0 0.0
    %733 = vmatpush1.msra.mxu0 0.0
    %734 = vmatprep.subr.mxu0 0.0
    %735 = vmatpush1.msra.mxu0 0.0
    %736 = vmatprep.subr.mxu0 0.0
    %737 = vmatpush1.msra.mxu0 %v182
    %738 = vmatprep.subr.mxu0 0.0
    %739 = vmatpush1.msra.mxu0 %v181
    %740 = vmatprep.subr.mxu0 0.0
    %741 = vmatpush1.msra.mxu0 %v180
    %742 = vmatprep.subr.mxu0 0.0
    %743 = vmatpush1.msra.mxu0 %v179
    %744 = vmatprep.subr.mxu0 0.0
    %745 = vmatpush2.msra.mxu0 0.0
    %746 = vmatprep.subr.mxu0 0.0
    %747 = vmatpush2.msra.mxu0 0.0
    %748 = vmatprep.subr.mxu0 0.0
    %749 = vmatpush2.msra.mxu0 0.0
    %750 = vmatprep.subr.mxu0 0.0
    %751 = vmatpush2.msra.mxu0 0.0
    %752 = vmatprep.subr.mxu0 0.0
    %753 = vmatpush2.msra.mxu0 0.0
    %754 = vmatprep.subr.mxu0 0.0
    %755 = vmatpush2.msra.mxu0 0.0
    %756 = vmatprep.subr.mxu0 0.0
    %757 = vmatpush2.msra.mxu0 0.0
    %758 = vmatprep.subr.mxu0 0.0
    %759 = vmatpush2.msra.mxu0 0.0
    %760 = vmatprep.subr.mxu0 0.0
    %761 = vmatpush2.msra.mxu0 0.0
    %762 = vmatprep.subr.mxu0 0.0
    %763 = vmatpush2.msra.mxu0 0.0
    %764 = vmatprep.subr.mxu0 0.0
    %765 = vmatpush2.msra.mxu0 0.0
    %766 = vmatprep.subr.mxu0 0.0
    %767 = vmatpush2.msra.mxu0 0.0
    %768 = vmatprep.subr.mxu0 0.0
    %769 = vmatpush2.msra.mxu0 0.0
    %770 = vmatprep.subr.mxu0 0.0
    %771 = vmatpush2.msra.mxu0 0.0
    %772 = vmatprep.subr.mxu0 0.0
    %773 = vmatpush2.msra.mxu0 0.0
    %774 = vmatprep.subr.mxu0 0.0
    %775 = vmatpush2.msra.mxu0 0.0
    %776 = vmatprep.mubr.f32.mxu0 0.0
    %777 = vmatmul.mubr.f32.gmra.mxu0 %v710
    %v778 = vpop.f32.mrf.mxu0
    %v779 = vadd.f32 0.0, %v778
    %v780 = vpop.f32.mrf.mxu0
    %781 = vdwg.mxu0
    %v782 = vadd.f32 %v709, %v779
    %v783 = vxor.u32 %v782, 2147483648
    %v784 = vmul.f32 %v783, 1.442695
    %v785 = vpow.pop %v784
    %v786 = vadd.f32 %v785, 1.0
    %v787 = vrcp.pop %v786
    %v788 = vmul.f32 1.0, %v787
    %v789 = vtanh.pop %v782
    %v790 = vmul.f32 %v788, %v695
    %792 = vrot.lane.b32.xlu0 %v789, 64
    %v793 = vpop.permute.xlu0 %792
    %v795 = vmul.f32 %v788, %v793
    %797 = vrot.lane.b32.xlu0 %v795, 32
    %v798 = vpop.permute.xlu0 %797
    %v800 = vadd.f32 %v790, %v798
    %v801 = vtanh.pop %v800
    %803 = vrot.lane.b32.xlu0 %v801, 64
    %v804 = vpop.permute.xlu0 %803
    %v806 = vmul.f32 %v788, %v804
    %808 = vrot.lane.b32.xlu0 %v806, 32
    %v809 = vpop.permute.xlu0 %808
    %s811 = scalar_lea.vmem [#allocation3], 40
    %812 = vst.msk [vmem:[%s811] sm:$0xff] %vm184, %v809
    %s813 = scalar_lea.vmem [#allocation2], 48
    %v814 = vld [vmem:[%s813] sm:$0xff]
    %v815 = vsel %vm184, %v809, 0
    %817 = vmatprep.subr.mxu0 0.0
    %818 = vmatpush1.msra.mxu0 0.0
    %819 = vmatprep.subr.mxu0 0.0
    %820 = vmatpush1.msra.mxu0 0.0
    %821 = vmatprep.subr.mxu0 0.0
    %822 = vmatpush1.msra.mxu0 0.0
    %823 = vmatprep.subr.mxu0 0.0
    %824 = vmatpush1.msra.mxu0 0.0
    %825 = vmatprep.subr.mxu0 0.0
    %826 = vmatpush1.msra.mxu0 0.0
    %827 = vmatprep.subr.mxu0 0.0
    %828 = vmatpush1.msra.mxu0 0.0
    %829 = vmatprep.subr.mxu0 0.0
    %830 = vmatpush1.msra.mxu0 0.0
    %831 = vmatprep.subr.mxu0 0.0
    %832 = vmatpush1.msra.mxu0 0.0
    %833 = vmatprep.subr.mxu0 0.0
    %834 = vmatpush1.msra.mxu0 0.0
    %835 = vmatprep.subr.mxu0 0.0
    %836 = vmatpush1.msra.mxu0 0.0
    %837 = vmatprep.subr.mxu0 0.0
    %838 = vmatpush1.msra.mxu0 0.0
    %839 = vmatprep.subr.mxu0 0.0
    %840 = vmatpush1.msra.mxu0 0.0
    %841 = vmatprep.subr.mxu0 0.0
    %842 = vmatpush1.msra.mxu0 %v182
    %843 = vmatprep.subr.mxu0 0.0
    %844 = vmatpush1.msra.mxu0 %v181
    %845 = vmatprep.subr.mxu0 0.0
    %846 = vmatpush1.msra.mxu0 %v180
    %847 = vmatprep.subr.mxu0 0.0
    %848 = vmatpush1.msra.mxu0 %v179
    %849 = vmatprep.subr.mxu0 0.0
    %850 = vmatpush2.msra.mxu0 0.0
    %851 = vmatprep.subr.mxu0 0.0
    %852 = vmatpush2.msra.mxu0 0.0
    %853 = vmatprep.subr.mxu0 0.0
    %854 = vmatpush2.msra.mxu0 0.0
    %855 = vmatprep.subr.mxu0 0.0
    %856 = vmatpush2.msra.mxu0 0.0
    %857 = vmatprep.subr.mxu0 0.0
    %858 = vmatpush2.msra.mxu0 0.0
    %859 = vmatprep.subr.mxu0 0.0
    %860 = vmatpush2.msra.mxu0 0.0
    %861 = vmatprep.subr.mxu0 0.0
    %862 = vmatpush2.msra.mxu0 0.0
    %863 = vmatprep.subr.mxu0 0.0
    %864 = vmatpush2.msra.mxu0 0.0
    %865 = vmatprep.subr.mxu0 0.0
    %866 = vmatpush2.msra.mxu0 0.0
    %867 = vmatprep.subr.mxu0 0.0
    %868 = vmatpush2.msra.mxu0 0.0
    %869 = vmatprep.subr.mxu0 0.0
    %870 = vmatpush2.msra.mxu0 0.0
    %871 = vmatprep.subr.mxu0 0.0
    %872 = vmatpush2.msra.mxu0 0.0
    %873 = vmatprep.subr.mxu0 0.0
    %874 = vmatpush2.msra.mxu0 0.0
    %875 = vmatprep.subr.mxu0 0.0
    %876 = vmatpush2.msra.mxu0 0.0
    %877 = vmatprep.subr.mxu0 0.0
    %878 = vmatpush2.msra.mxu0 0.0
    %879 = vmatprep.subr.mxu0 0.0
    %880 = vmatpush2.msra.mxu0 0.0
    %881 = vmatprep.mubr.f32.mxu0 0.0
    %882 = vmatmul.mubr.f32.gmra.mxu0 %v815
    %v883 = vpop.f32.mrf.mxu0
    %v884 = vadd.f32 0.0, %v883
    %v885 = vpop.f32.mrf.mxu0
    %886 = vdwg.mxu0
    %v887 = vadd.f32 %v814, %v884
    %v888 = vxor.u32 %v887, 2147483648
    %v889 = vmul.f32 %v888, 1.442695
    %v890 = vpow.pop %v889
    %v891 = vadd.f32 %v890, 1.0
    %v892 = vrcp.pop %v891
    %v893 = vmul.f32 1.0, %v892
    %v894 = vtanh.pop %v887
    %v895 = vmul.f32 %v893, %v800
    %897 = vrot.lane.b32.xlu0 %v894, 64
    %v898 = vpop.permute.xlu0 %897
    %v900 = vmul.f32 %v893, %v898
    %902 = vrot.lane.b32.xlu0 %v900, 32
    %v903 = vpop.permute.xlu0 %902
    %v905 = vadd.f32 %v895, %v903
    %v906 = vtanh.pop %v905
    %908 = vrot.lane.b32.xlu0 %v906, 64
    %v909 = vpop.permute.xlu0 %908
    %v911 = vmul.f32 %v893, %v909
    %913 = vrot.lane.b32.xlu0 %v911, 32
    %v914 = vpop.permute.xlu0 %913
    %s916 = scalar_lea.vmem [#allocation3], 48
    %917 = vst.msk [vmem:[%s916] sm:$0xff] %vm184, %v914
    %s918 = scalar_lea.vmem [#allocation2], 56
    %v919 = vld [vmem:[%s918] sm:$0xff]
    %v920 = vsel %vm184, %v914, 0
    %922 = vmatprep.subr.mxu0 0.0
    %923 = vmatpush1.msra.mxu0 0.0
    %924 = vmatprep.subr.mxu0 0.0
    %925 = vmatpush1.msra.mxu0 0.0
    %926 = vmatprep.subr.mxu0 0.0
    %927 = vmatpush1.msra.mxu0 0.0
    %928 = vmatprep.subr.mxu0 0.0
    %929 = vmatpush1.msra.mxu0 0.0
    %930 = vmatprep.subr.mxu0 0.0
    %931 = vmatpush1.msra.mxu0 0.0
    %932 = vmatprep.subr.mxu0 0.0
    %933 = vmatpush1.msra.mxu0 0.0
    %934 = vmatprep.subr.mxu0 0.0
    %935 = vmatpush1.msra.mxu0 0.0
    %936 = vmatprep.subr.mxu0 0.0
    %937 = vmatpush1.msra.mxu0 0.0
    %938 = vmatprep.subr.mxu0 0.0
    %939 = vmatpush1.msra.mxu0 0.0
    %940 = vmatprep.subr.mxu0 0.0
    %941 = vmatpush1.msra.mxu0 0.0
    %942 = vmatprep.subr.mxu0 0.0
    %943 = vmatpush1.msra.mxu0 0.0
    %944 = vmatprep.subr.mxu0 0.0
    %945 = vmatpush1.msra.mxu0 0.0
    %946 = vmatprep.subr.mxu0 0.0
    %947 = vmatpush1.msra.mxu0 %v182
    %948 = vmatprep.subr.mxu0 0.0
    %949 = vmatpush1.msra.mxu0 %v181
    %950 = vmatprep.subr.mxu0 0.0
    %951 = vmatpush1.msra.mxu0 %v180
    %952 = vmatprep.subr.mxu0 0.0
    %953 = vmatpush1.msra.mxu0 %v179
    %954 = vmatprep.subr.mxu0 0.0
    %955 = vmatpush2.msra.mxu0 0.0
    %956 = vmatprep.subr.mxu0 0.0
    %957 = vmatpush2.msra.mxu0 0.0
    %958 = vmatprep.subr.mxu0 0.0
    %959 = vmatpush2.msra.mxu0 0.0
    %960 = vmatprep.subr.mxu0 0.0
    %961 = vmatpush2.msra.mxu0 0.0
    %962 = vmatprep.subr.mxu0 0.0
    %963 = vmatpush2.msra.mxu0 0.0
    %964 = vmatprep.subr.mxu0 0.0
    %965 = vmatpush2.msra.mxu0 0.0
    %966 = vmatprep.subr.mxu0 0.0
    %967 = vmatpush2.msra.mxu0 0.0
    %968 = vmatprep.subr.mxu0 0.0
    %969 = vmatpush2.msra.mxu0 0.0
    %970 = vmatprep.subr.mxu0 0.0
    %971 = vmatpush2.msra.mxu0 0.0
    %972 = vmatprep.subr.mxu0 0.0
    %973 = vmatpush2.msra.mxu0 0.0
    %974 = vmatprep.subr.mxu0 0.0
    %975 = vmatpush2.msra.mxu0 0.0
    %976 = vmatprep.subr.mxu0 0.0
    %977 = vmatpush2.msra.mxu0 0.0
    %978 = vmatprep.subr.mxu0 0.0
    %979 = vmatpush2.msra.mxu0 0.0
    %980 = vmatprep.subr.mxu0 0.0
    %981 = vmatpush2.msra.mxu0 0.0
    %982 = vmatprep.subr.mxu0 0.0
    %983 = vmatpush2.msra.mxu0 0.0
    %984 = vmatprep.subr.mxu0 0.0
    %985 = vmatpush2.msra.mxu0 0.0
    %986 = vmatprep.mubr.f32.mxu0 0.0
    %987 = vmatmul.mubr.f32.gmra.mxu0 %v920
    %v988 = vpop.f32.mrf.mxu0
    %v989 = vadd.f32 0.0, %v988
    %v990 = vpop.f32.mrf.mxu0
    %991 = vdwg.mxu0
    %v992 = vadd.f32 %v919, %v989
    %v993 = vxor.u32 %v992, 2147483648
    %v994 = vmul.f32 %v993, 1.442695
    %v995 = vpow.pop %v994
    %v996 = vadd.f32 %v995, 1.0
    %v997 = vrcp.pop %v996
    %v998 = vmul.f32 1.0, %v997
    %v999 = vtanh.pop %v992
    %v1000 = vmul.f32 %v998, %v905
    %1002 = vrot.lane.b32.xlu0 %v999, 64
    %v1003 = vpop.permute.xlu0 %1002
    %v1005 = vmul.f32 %v998, %v1003
    %1007 = vrot.lane.b32.xlu0 %v1005, 32
    %v1008 = vpop.permute.xlu0 %1007
    %v1010 = vadd.f32 %v1000, %v1008
    %v1011 = vtanh.pop %v1010
    %1013 = vrot.lane.b32.xlu0 %v1011, 64
    %v1014 = vpop.permute.xlu0 %1013
    %v1016 = vmul.f32 %v998, %v1014
    %1018 = vrot.lane.b32.xlu0 %v1016, 32
    %v1019 = vpop.permute.xlu0 %1018
    %s1021 = scalar_lea.vmem [#allocation3], 56
    %1022 = vst.msk [vmem:[%s1021] sm:$0xff] %vm184, %v1019
    %v1023 = vld [vmem:[#allocation3] sm:$0xff]
    %v1024 = vld [vmem:[#allocation3 + $0x8] sm:$0xff]
    %v1025 = vld [vmem:[#allocation3 + $0x10] sm:$0xff]
    %v1026 = vld [vmem:[#allocation3 + $0x18] sm:$0xff]
    %v1027 = vld [vmem:[#allocation3 + $0x20] sm:$0xff]
    %v1028 = vld [vmem:[#allocation3 + $0x28] sm:$0xff]
    %v1029 = vld [vmem:[#allocation3 + $0x30] sm:$0xff]
    %v1030 = vld [vmem:[#allocation3 + $0x38] sm:$0xff]
    %v1031 = vld [vmem:[%s4] sm:$0xff]
    %v1032 = vld [vmem:[%s4 + $0x8] sm:$0xff]
    %v1033 = vld [vmem:[%s4 + $0x10] sm:$0xff]
    %v1034 = vld [vmem:[%s4 + $0x18] sm:$0xff]
    %v1035 = vld [vmem:[%s5] sm:$0x1]
    %v1037 = vlaneseq
    %v1038 = vshrl.u32 %v1037, 7
    %v1039 = vsub.s32 0, %v1038
    %v1040 = vrot.slane %v1035, %v1039
    %v1043 = vsel %vm184, %v1023, 0
    %v1046 = vsel %vm184, %v1024, 0
    %v1049 = vsel %vm184, %v1025, 0
    %v1052 = vsel %vm184, %v1026, 0
    %v1055 = vsel %vm184, %v1027, 0
    %v1058 = vsel %vm184, %v1028, 0
    %v1061 = vsel %vm184, %v1029, 0
    %v1064 = vsel %vm184, %v1030, 0
    %1066 = vmatprep.subr.mxu0 0.0
    %1067 = vmatpush1.msra.mxu0 0.0
    %1068 = vmatprep.subr.mxu0 0.0
    %1069 = vmatpush1.msra.mxu0 0.0
    %1070 = vmatprep.subr.mxu0 0.0
    %1071 = vmatpush1.msra.mxu0 0.0
    %1072 = vmatprep.subr.mxu0 0.0
    %1073 = vmatpush1.msra.mxu0 0.0
    %1074 = vmatprep.subr.mxu0 0.0
    %1075 = vmatpush1.msra.mxu0 0.0
    %1076 = vmatprep.subr.mxu0 0.0
    %1077 = vmatpush1.msra.mxu0 0.0
    %1078 = vmatprep.subr.mxu0 0.0
    %1079 = vmatpush1.msra.mxu0 0.0
    %1080 = vmatprep.subr.mxu0 0.0
    %1081 = vmatpush1.msra.mxu0 0.0
    %1082 = vmatprep.subr.mxu0 0.0
    %1083 = vmatpush1.msra.mxu0 0.0
    %1084 = vmatprep.subr.mxu0 0.0
    %1085 = vmatpush1.msra.mxu0 0.0
    %1086 = vmatprep.subr.mxu0 0.0
    %1087 = vmatpush1.msra.mxu0 0.0
    %1088 = vmatprep.subr.mxu0 0.0
    %1089 = vmatpush1.msra.mxu0 0.0
    %1090 = vmatprep.subr.mxu0 0.0
    %1091 = vmatpush1.msra.mxu0 %v1034
    %1092 = vmatprep.subr.mxu0 0.0
    %1093 = vmatpush1.msra.mxu0 %v1033
    %1094 = vmatprep.subr.mxu0 0.0
    %1095 = vmatpush1.msra.mxu0 %v1032
    %1096 = vmatprep.subr.mxu0 0.0
    %1097 = vmatpush1.msra.mxu0 %v1031
    %1098 = vmatprep.subr.mxu0 0.0
    %1099 = vmatpush2.msra.mxu0 0.0
    %1100 = vmatprep.subr.mxu0 0.0
    %1101 = vmatpush2.msra.mxu0 0.0
    %1102 = vmatprep.subr.mxu0 0.0
    %1103 = vmatpush2.msra.mxu0 0.0
    %1104 = vmatprep.subr.mxu0 0.0
    %1105 = vmatpush2.msra.mxu0 0.0
    %1106 = vmatprep.subr.mxu0 0.0
    %1107 = vmatpush2.msra.mxu0 0.0
    %1108 = vmatprep.subr.mxu0 0.0
    %1109 = vmatpush2.msra.mxu0 0.0
    %1110 = vmatprep.subr.mxu0 0.0
    %1111 = vmatpush2.msra.mxu0 0.0
    %1112 = vmatprep.subr.mxu0 0.0
    %1113 = vmatpush2.msra.mxu0 0.0
    %1114 = vmatprep.subr.mxu0 0.0
    %1115 = vmatpush2.msra.mxu0 0.0
    %1116 = vmatprep.subr.mxu0 0.0
    %1117 = vmatpush2.msra.mxu0 0.0
    %1118 = vmatprep.subr.mxu0 0.0
    %1119 = vmatpush2.msra.mxu0 0.0
    %1120 = vmatprep.subr.mxu0 0.0
    %1121 = vmatpush2.msra.mxu0 0.0
    %1122 = vmatprep.subr.mxu0 0.0
    %1123 = vmatpush2.msra.mxu0 0.0
    %1124 = vmatprep.subr.mxu0 0.0
    %1125 = vmatpush2.msra.mxu0 0.0
    %1126 = vmatprep.subr.mxu0 0.0
    %1127 = vmatpush2.msra.mxu0 0.0
    %1128 = vmatprep.subr.mxu0 0.0
    %1129 = vmatpush2.msra.mxu0 0.0
    %1130 = vmatprep.mubr.f32.mxu0 0.0
    %1131 = vmatmul.mubr.f32.gmra.mxu0 %v1043
    %v1132 = vpop.f32.mrf.mxu0
    %v1133 = vadd.f32 %v1040, %v1132
    %v1134 = vpop.f32.mrf.mxu0
    %1135 = vmatprep.mubr.f32.mxu0 0.0
    %1136 = vmatmul.mubr.f32.gmra.mxu0 %v1046
    %v1137 = vpop.f32.mrf.mxu0
    %v1138 = vadd.f32 %v1040, %v1137
    %v1139 = vpop.f32.mrf.mxu0
    %1140 = vmatprep.mubr.f32.mxu0 0.0
    %1141 = vmatmul.mubr.f32.gmra.mxu0 %v1049
    %v1142 = vpop.f32.mrf.mxu0
    %v1143 = vadd.f32 %v1040, %v1142
    %v1144 = vpop.f32.mrf.mxu0
    %1145 = vmatprep.mubr.f32.mxu0 0.0
    %1146 = vmatmul.mubr.f32.gmra.mxu0 %v1052
    %v1147 = vpop.f32.mrf.mxu0
    %v1148 = vadd.f32 %v1040, %v1147
    %v1149 = vpop.f32.mrf.mxu0
    %1150 = vmatprep.mubr.f32.mxu0 0.0
    %1151 = vmatmul.mubr.f32.gmra.mxu0 %v1055
    %v1152 = vpop.f32.mrf.mxu0
    %v1153 = vadd.f32 %v1040, %v1152
    %v1154 = vpop.f32.mrf.mxu0
    %1155 = vmatprep.mubr.f32.mxu0 0.0
    %1156 = vmatmul.mubr.f32.gmra.mxu0 %v1058
    %v1157 = vpop.f32.mrf.mxu0
    %v1158 = vadd.f32 %v1040, %v1157
    %v1159 = vpop.f32.mrf.mxu0
    %1160 = vmatprep.mubr.f32.mxu0 0.0
    %1161 = vmatmul.mubr.f32.gmra.mxu0 %v1061
    %v1162 = vpop.f32.mrf.mxu0
    %v1163 = vadd.f32 %v1040, %v1162
    %v1164 = vpop.f32.mrf.mxu0
    %1165 = vmatprep.mubr.f32.mxu0 0.0
    %1166 = vmatmul.mubr.f32.gmra.mxu0 %v1064
    %v1167 = vpop.f32.mrf.mxu0
    %v1168 = vadd.f32 %v1040, %v1167
    %v1169 = vpop.f32.mrf.mxu0
    %1170 = vdwg.mxu0
    %v1171 = vlaneseq
    %v1172 = vand.u32 %v1171, 127
    %vm1173 = vcmp.lt.s32.totalorder %v1172, 8
    %v1174 = vsel %vm1173, %v1133, -1e+30
    %v1175 = vsel %vm1173, %v1138, -1e+30
    %v1176 = vsel %vm1173, %v1143, -1e+30
    %v1177 = vsel %vm1173, %v1148, -1e+30
    %v1178 = vsel %vm1173, %v1153, -1e+30
    %v1179 = vsel %vm1173, %v1158, -1e+30
    %v1180 = vsel %vm1173, %v1163, -1e+30
    %v1181 = vsel %vm1173, %v1168, -1e+30
    %1182 = vmax.xlane.f32.xlu0 %v1174
    %v1183 = vpop.xlane.xlu0 %1182
    %1184 = vmax.xlane.f32.xlu0 %v1175
    %v1185 = vpop.xlane.xlu0 %1184
    %1186 = vmax.xlane.f32.xlu0 %v1176
    %v1187 = vpop.xlane.xlu0 %1186
    %1188 = vmax.xlane.f32.xlu0 %v1177
    %v1189 = vpop.xlane.xlu0 %1188
    %1190 = vmax.xlane.f32.xlu0 %v1178
    %v1191 = vpop.xlane.xlu0 %1190
    %1192 = vmax.xlane.f32.xlu0 %v1179
    %v1193 = vpop.xlane.xlu0 %1192
    %1194 = vmax.xlane.f32.xlu0 %v1180
    %v1195 = vpop.xlane.xlu0 %1194
    %1196 = vmax.xlane.f32.xlu0 %v1181
    %v1197 = vpop.xlane.xlu0 %1196
    %v1198 = vsub.f32 %v1174, %v1183
    %v1199 = vsub.f32 %v1175, %v1185
    %v1200 = vsub.f32 %v1176, %v1187
    %v1201 = vsub.f32 %v1177, %v1189
    %v1202 = vsub.f32 %v1178, %v1191
    %v1203 = vsub.f32 %v1179, %v1193
    %v1204 = vsub.f32 %v1180, %v1195
    %v1205 = vsub.f32 %v1181, %v1197
    %v1206 = vmul.f32 %v1198, 1.442695
    %v1207 = vpow.pop %v1206
    %v1208 = vmul.f32 %v1199, 1.442695
    %v1209 = vpow.pop %v1208
    %v1210 = vmul.f32 %v1200, 1.442695
    %v1211 = vpow.pop %v1210
    %v1212 = vmul.f32 %v1201, 1.442695
    %v1213 = vpow.pop %v1212
    %v1214 = vmul.f32 %v1202, 1.442695
    %v1215 = vpow.pop %v1214
    %v1216 = vmul.f32 %v1203, 1.442695
    %v1217 = vpow.pop %v1216
    %v1218 = vmul.f32 %v1204, 1.442695
    %v1219 = vpow.pop %v1218
    %v1220 = vmul.f32 %v1205, 1.442695
    %v1221 = vpow.pop %v1220
    %1222 = vadd.xlane.f32.xlu0 %v1207
    %v1223 = vpop.xlane.xlu0 %1222
    %1224 = vadd.xlane.f32.xlu0 %v1209
    %v1225 = vpop.xlane.xlu0 %1224
    %1226 = vadd.xlane.f32.xlu0 %v1211
    %v1227 = vpop.xlane.xlu0 %1226
    %1228 = vadd.xlane.f32.xlu0 %v1213
    %v1229 = vpop.xlane.xlu0 %1228
    %1230 = vadd.xlane.f32.xlu0 %v1215
    %v1231 = vpop.xlane.xlu0 %1230
    %1232 = vadd.xlane.f32.xlu0 %v1217
    %v1233 = vpop.xlane.xlu0 %1232
    %1234 = vadd.xlane.f32.xlu0 %v1219
    %v1235 = vpop.xlane.xlu0 %1234
    %1236 = vadd.xlane.f32.xlu0 %v1221
    %v1237 = vpop.xlane.xlu0 %1236
    %v1238 = vlog2.pop %v1223
    %v1239 = vmul.f32 %v1238, 0.6931472
    %v1240 = vlog2.pop %v1225
    %v1241 = vmul.f32 %v1240, 0.6931472
    %v1242 = vlog2.pop %v1227
    %v1243 = vmul.f32 %v1242, 0.6931472
    %v1244 = vlog2.pop %v1229
    %v1245 = vmul.f32 %v1244, 0.6931472
    %v1246 = vlog2.pop %v1231
    %v1247 = vmul.f32 %v1246, 0.6931472
    %v1248 = vlog2.pop %v1233
    %v1249 = vmul.f32 %v1248, 0.6931472
    %v1250 = vlog2.pop %v1235
    %v1251 = vmul.f32 %v1250, 0.6931472
    %v1252 = vlog2.pop %v1237
    %v1253 = vmul.f32 %v1252, 0.6931472
    %v1254 = vsub.f32 %v1198, %v1239
    %v1255 = vsub.f32 %v1199, %v1241
    %v1256 = vsub.f32 %v1200, %v1243
    %v1257 = vsub.f32 %v1201, %v1245
    %v1258 = vsub.f32 %v1202, %v1247
    %v1259 = vsub.f32 %v1203, %v1249
    %v1260 = vsub.f32 %v1204, %v1251
    %v1261 = vsub.f32 %v1205, %v1253
    %1262 = vst [vmem:[#allocation4] sm:$0xff] %v1254
    %1263 = vst [vmem:[#allocation4 + $0x8] sm:$0xff] %v1255
    %1264 = vst [vmem:[#allocation4 + $0x10] sm:$0xff] %v1256
    %1265 = vst [vmem:[#allocation4 + $0x18] sm:$0xff] %v1257
    %1266 = vst [vmem:[#allocation4 + $0x20] sm:$0xff] %v1258
    %1267 = vst [vmem:[#allocation4 + $0x28] sm:$0xff] %v1259
    %1268 = vst [vmem:[#allocation4 + $0x30] sm:$0xff] %v1260
    %1269 = vst [vmem:[#allocation4 + $0x38] sm:$0xff] %v1261
    // Predicated region
    $region26: #{tpu_custom_call.1} parent=1 // pred_check
      _
    $region27: #{tpu_custom_call.1} parent=1 // pred_check_branch
      %1271 = sbr.rel (0) target = $region29
    $region28: #{tpu_custom_call.1} parent=1 // pred_region
      %s1273 = ssub.s32 1024, 1024
      %1274 = vsyncadd [#allocation5], %s1273
      %s1275 = sshll.u32 [#allocation4], 4
      %s1276 = int_to_ptr.vmem [resolvable:$true] %s1275
      %1281 = dma.vmem_to_hbm [thread:$0]  %s1276, 1024, %s6, [#allocation5], 128, 128, 8
    $region29: #{tpu_custom_call.1} parent=1 // pred_fallthru
      _
    // Predicated region
    $region30: #{tpu_custom_call.1} parent=1 // pred_check
      _
    $region31: #{tpu_custom_call.1} parent=1 // pred_check_branch
      %1283 = sbr.rel (0) target = $region33
    $region32: #{tpu_custom_call.1} parent=1 // pred_region
      %1284 = dma.done [#allocation5], 1024
    $region33: #{tpu_custom_call.1} parent=1 // pred_fallthru
      _
    %1285 = vsyncpa [#allocation5], 1

</llo_original>
